<compile_context>
chip_gen: v5e
topology: v5e:2x2
jax: 0.10.0
libtpu: 0.0.40
codegen_flags: <defaults>
</compile_context>

<pallas_src>
import math
import functools

import jax
import jax.numpy as jnp
from jax import lax
from jax.experimental import pallas as pl
from jax.experimental.pallas import tpu as pltpu


def _layer_norm(v, gamma, beta, eps=1e-5):
    # f32 statistics (mandatory fast path on v5e; matches nn.LayerNorm).
    mu = jnp.mean(v, axis=-1, keepdims=True)
    d = v - mu
    var = jnp.mean(d * d, axis=-1, keepdims=True)
    return d * lax.rsqrt(var + eps) * gamma + beta


def _encoder_kernel(num_heads, q_tile,
                    x_ref, kmask_ref, npad_ref,
                    wqkv_ref, bqkv_ref,
                    wo_ref, bo_ref,
                    g1_ref, be1_ref,
                    w1_ref, bf1_ref, w2_ref, bf2_ref,
                    g2_ref, be2_ref,
                    out_ref,
                    q_sc):
    x_bf = x_ref[0].astype(jnp.bfloat16)       # (S, E)
    kmask = kmask_ref[0]                        # (1, S) key-validity
    S, E = x_bf.shape
    H = num_heads
    dh = E // H
    scale = 1.0 / math.sqrt(dh)

    # ---- fused QKV projection: one MXU run, f32 accumulation ----------------
    qkv = jnp.dot(x_bf, wqkv_ref[...],
                  preferred_element_type=jnp.float32) + bqkv_ref[...]   # (S, 3E)

    # Scaled Q stashed lane-dense in a bf16 VMEM scratch (sliced per q-tile);
    # K / V pre-transposed once to head-major (H, S, dh) bf16 loop invariants.
    q_sc[...] = (qkv[:, :E] * scale).astype(jnp.bfloat16)
    k_hb = qkv[:, E:2 * E].reshape(S, H, dh).transpose(1, 0, 2).astype(jnp.bfloat16)
    v_hb = qkv[:, 2 * E:].reshape(S, H, dh).transpose(1, 0, 2).astype(jnp.bfloat16)

    # Additive key mask computed once, broadcast over heads and query rows.
    mask_bias = jnp.where(kmask > 0.0, 0.0, -1e9).reshape(1, 1, S)

    def tile_body(t, carry):
        r0 = t * q_tile
        if not isinstance(r0, int):
            r0 = pl.multiple_of(r0, q_tile)

        # ---- attention for this query tile, all heads batched --------------
        q_t = q_sc[pl.ds(r0, q_tile), :].reshape(q_tile, H, dh)
        q_t = q_t.transpose(1, 0, 2)                                   # (H, tq, dh)
        scores = jnp.einsum('hqd,hkd->hqk', q_t, k_hb,
                            preferred_element_type=jnp.float32)        # (H, tq, S)
        scores = scores + mask_bias
        scores = scores - jnp.max(scores, axis=-1, keepdims=True)
        p = jnp.exp(scores)
        p = p / jnp.sum(p, axis=-1, keepdims=True)      # exact: parity w/ torch
        pv = jnp.einsum('hqk,hkd->hqd', p.astype(jnp.bfloat16), v_hb,
                        preferred_element_type=jnp.float32)            # (H, tq, dh)
        attn = pv.transpose(1, 0, 2).reshape(q_tile, E).astype(jnp.bfloat16)
        attn = jnp.dot(attn, wo_ref[...],
                       preferred_element_type=jnp.float32) + bo_ref[...]

        # ---- residual + norm1 + non-pad mask --------------------------------
        x_t = x_ref[0, pl.ds(r0, q_tile), :]
        np_t = npad_ref[0, pl.ds(r0, q_tile), :]
        h1 = _layer_norm(x_t + attn, g1_ref[...], be1_ref[...]) * np_t

        # ---- feed forward (+ residual) + norm2 + non-pad mask ---------------
        ff = jnp.dot(h1.astype(jnp.bfloat16), w1_ref[...],
                     preferred_element_type=jnp.float32) + bf1_ref[...]
        ff = jnp.maximum(ff, 0.0)
        ff = jnp.dot(ff.astype(jnp.bfloat16), w2_ref[...],
                     preferred_element_type=jnp.float32) + bf2_ref[...]
        h2 = _layer_norm(h1 + ff, g2_ref[...], be2_ref[...]) * np_t

        out_ref[0, pl.ds(r0, q_tile), :] = h2.astype(out_ref.dtype)
        return carry

    n_tiles = S // q_tile
    if n_tiles == 1:
        tile_body(0, 0)                       # fully static indices
    else:
        lax.fori_loop(0, n_tiles, tile_body, 0)   # bounded live ranges per tile


def _vmem_limit_bytes():
    # ~75% of physical VMEM: ~96 MiB on v5e/v6e (128 MiB), ~48 MiB on v7x (64 MiB).
    try:
        cap = pltpu.get_tpu_info().vmem_capacity_bytes
    except Exception:
        cap = 64 * 1024 * 1024
    return int(min(cap * 3 // 4, 110 * 1024 * 1024))


def _default_q_tile(S):
    # Prefer large, clean tiles; short sequences are a single tile.
    for t in (256, 128):
        if S % t == 0:
            return t
    return S


def encoder_layer(x, key_mask, non_pad_mask, params, num_heads, q_tile=None):
    """x: (B,S,E) f32; key_mask: (B,S) with 1.0 = attend / 0.0 = masked key
    (the dense (B,S,S) reference mask is this vector broadcast over queries);
    non_pad_mask: (B,S)."""
    B, S, E = x.shape
    if q_tile is None:
        q_tile = _default_q_tile(S)
    assert S % q_tile == 0, "S must be divisible by q_tile"

    key_mask = key_mask.reshape(B, 1, S).astype(x.dtype)       # lane-dense
    non_pad_mask = non_pad_mask.reshape(B, S, 1).astype(x.dtype)

    param_list = [
        params["wqkv"], params["bqkv"], params["wo"], params["bo"],
        params["g1"], params["be1"],
        params["w1"], params["bf1"], params["w2"], params["bf2"],
        params["g2"], params["be2"],
    ]

    # Weights / biases: whole array resident in VMEM for the full call.
    weight_spec = pl.BlockSpec(memory_space=pltpu.MemorySpace.VMEM)

    in_specs = [
        pl.BlockSpec((1, S, E), lambda b: (b, 0, 0)),   # x
        pl.BlockSpec((1, 1, S), lambda b: (b, 0, 0)),   # key-validity mask
        pl.BlockSpec((1, S, 1), lambda b: (b, 0, 0)),   # non_pad_mask
    ] + [weight_spec] * len(param_list)

    out_spec = pl.BlockSpec((1, S, E), lambda b: (b, 0, 0))

    kernel = functools.partial(_encoder_kernel, num_heads, q_tile)

    return pl.pallas_call(
        kernel,
        out_shape=jax.ShapeDtypeStruct((B, S, E), x.dtype),
        grid=(B,),
        in_specs=in_specs,
        out_specs=out_spec,
        scratch_shapes=[pltpu.VMEM((S, E), jnp.bfloat16)],   # scaled Q slab
        compiler_params=pltpu.CompilerParams(
            dimension_semantics=("parallel",),
            vmem_limit_bytes=_vmem_limit_bytes()),
    )(x, key_mask, non_pad_mask, *param_list)


def init_params(key, emb_dim, ff_dim):
    ks = jax.random.split(key, 6)
    s = 0.02
    f32, bf16 = jnp.float32, jnp.bfloat16
    wq = s * jax.random.normal(ks[0], (emb_dim, emb_dim))
    wk = s * jax.random.normal(ks[1], (emb_dim, emb_dim))
    wv = s * jax.random.normal(ks[2], (emb_dim, emb_dim))
    return {
        # fused [Wq | Wk | Wv] -> one (E, 3E) bf16 MXU operand
        "wqkv": jnp.concatenate([wq, wk, wv], axis=1).astype(bf16),
        "bqkv": jnp.zeros((1, 3 * emb_dim), f32),
        "wo": (s * jax.random.normal(ks[3], (emb_dim, emb_dim))).astype(bf16),
        "bo": jnp.zeros((1, emb_dim), f32),
        # norm1
        "g1": jnp.ones((1, emb_dim), f32),
        "be1": jnp.zeros((1, emb_dim), f32),
        # feed forward
        "w1": (s * jax.random.normal(ks[4], (emb_dim, ff_dim))).astype(bf16),
        "bf1": jnp.zeros((1, ff_dim), f32),
        "w2": (s * jax.random.normal(ks[5], (ff_dim, emb_dim))).astype(bf16),
        "bf2": jnp.zeros((1, emb_dim), f32),
        # norm2
        "g2": jnp.ones((1, emb_dim), f32),
        "be2": jnp.zeros((1, emb_dim), f32),
    }


def encoder_layer_ref(x, key_mask, non_pad_mask, params, num_heads):
    """Pure-JAX reference with the same bf16 rounding points as the kernel."""
    B, S, E = x.shape
    dh = E // num_heads
    scale = 1.0 / math.sqrt(dh)
    bf16 = jnp.bfloat16

    x_bf = x.astype(bf16)
    qkv = jnp.einsum('bse,ef->bsf', x_bf, params["wqkv"],
                     preferred_element_type=jnp.float32) + params["bqkv"]
    q, k, v = qkv[..., :E], qkv[..., E:2 * E], qkv[..., 2 * E:]
    q = (q * scale).astype(bf16).reshape(B, S, num_heads, dh)
    k = k.astype(bf16).reshape(B, S, num_heads, dh)
    v = v.astype(bf16).reshape(B, S, num_heads, dh)

    scores = jnp.einsum('bqhd,bkhd->bhqk', q, k,
                        preferred_element_type=jnp.float32)
    bias = jnp.where(key_mask[:, None, None, :] > 0, 0.0, -1e9)
    p = jax.nn.softmax(scores + bias, axis=-1)
    pv = jnp.einsum('bhqk,bkhd->bqhd', p.astype(bf16), v,
                    preferred_element_type=jnp.float32).reshape(B, S, E)
    attn = jnp.einsum('bse,ef->bsf', pv.astype(bf16), params["wo"],
                      preferred_element_type=jnp.float32) + params["bo"]

    def ln(u, g, b, eps=1e-5):
        mu = u.mean(-1, keepdims=True)
        var = ((u - mu) ** 2).mean(-1, keepdims=True)
        return (u - mu) / jnp.sqrt(var + eps) * g + b

    npad = non_pad_mask[..., None].astype(x.dtype)
    h1 = ln(x + attn, params["g1"], params["be1"]) * npad
    ff = jnp.einsum('bse,ef->bsf', h1.astype(bf16), params["w1"],
                    preferred_element_type=jnp.float32) + params["bf1"]
    ff = jnp.maximum(ff, 0.0)
    ff = jnp.einsum('bsf,fe->bse', ff.astype(bf16), params["w2"],
                    preferred_element_type=jnp.float32) + params["bf2"]
    h2 = ln(h1 + ff, params["g2"], params["be2"]) * npad
    return h2


if __name__ == "__main__":
    # batch, seq, emb_dim, num_heads, ff_dim (small, but exercises the q-tile loop)
    B, S, E, H, F = 2, 16, 64, 4, 128

    key = jax.random.PRNGKey(0)
    k_x, k_p = jax.random.split(key)

    x = jax.random.normal(k_x, (B, S, E), dtype=jnp.float32)

    # batch 0: no padding; batch 1: last three tokens are padding.
    valid = jnp.array([[1.0] * S,
                       [1.0] * (S - 3) + [0.0] * 3], dtype=jnp.float32)   # (B, S)
    key_mask = valid            # key-validity vector (1 = attend)
    non_pad_mask = valid        # (B, S)

    params = init_params(k_p, E, F)

    # q_tile=8 -> two query tiles per sequence: exercises the in-kernel tile loop.
    out = encoder_layer(x, key_mask, non_pad_mask, params, num_heads=H, q_tile=8)
    out = jax.block_until_ready(out)

    assert out.shape == (B, S, E) and out.dtype == jnp.float32
    assert bool(jnp.all(jnp.isfinite(out)))

    ref = encoder_layer_ref(x, key_mask, non_pad_mask, params, num_heads=H)
    max_err = float(jnp.max(jnp.abs(out - ref)))
    assert max_err < 5e-2, f"kernel/reference mismatch: {max_err}"

    print("KERNEL_OK")
</pallas_src>

<mosaic_0001>
module attributes {stable_mosaic.version = 11 : i64} {
  func.func @_encoder_kernel(%arg0: i32, %arg1: memref<1x16x64xf32, #tpu.memory_space<vmem>>, %arg2: memref<1x1x16xf32, #tpu.memory_space<vmem>>, %arg3: memref<1x16x1xf32, #tpu.memory_space<vmem>>, %arg4: memref<64x192xbf16, #tpu.memory_space<vmem>>, %arg5: memref<1x192xf32, #tpu.memory_space<vmem>>, %arg6: memref<64x64xbf16, #tpu.memory_space<vmem>>, %arg7: memref<1x64xf32, #tpu.memory_space<vmem>>, %arg8: memref<1x64xf32, #tpu.memory_space<vmem>>, %arg9: memref<1x64xf32, #tpu.memory_space<vmem>>, %arg10: memref<64x128xbf16, #tpu.memory_space<vmem>>, %arg11: memref<1x128xf32, #tpu.memory_space<vmem>>, %arg12: memref<128x64xbf16, #tpu.memory_space<vmem>>, %arg13: memref<1x64xf32, #tpu.memory_space<vmem>>, %arg14: memref<1x64xf32, #tpu.memory_space<vmem>>, %arg15: memref<1x64xf32, #tpu.memory_space<vmem>>, %arg16: memref<1x16x64xf32, #tpu.memory_space<vmem>>, %arg17: memref<16x64xbf16, #tpu.memory_space<vmem>>) attributes {dimension_semantics = [#tpu.dimension_semantics<parallel>], iteration_bounds = array<i64: 2>, scalar_prefetch = 0 : i64, scratch_operands = 1 : i64, tpu.core_type = #tpu.core_type<tc>, window_params = [{transform_indices = @transform_0, window_bounds = array<i64: 1, 16, 64>}, {transform_indices = @transform_1, window_bounds = array<i64: 1, 1, 16>}, {transform_indices = @transform_2, window_bounds = array<i64: 1, 16, 1>}, {pipeline_mode = #tpu.pipeline_mode<synchronous>, transform_indices = @transform_3, window_bounds = array<i64: 64, 192>}, {pipeline_mode = #tpu.pipeline_mode<synchronous>, transform_indices = @transform_4, window_bounds = array<i64: 1, 192>}, {pipeline_mode = #tpu.pipeline_mode<synchronous>, transform_indices = @transform_5, window_bounds = array<i64: 64, 64>}, {pipeline_mode = #tpu.pipeline_mode<synchronous>, transform_indices = @transform_6, window_bounds = array<i64: 1, 64>}, {pipeline_mode = #tpu.pipeline_mode<synchronous>, transform_indices = @transform_7, window_bounds = array<i64: 1, 64>}, {pipeline_mode = #tpu.pipeline_mode<synchronous>, transform_indices = @transform_8, window_bounds = array<i64: 1, 64>}, {pipeline_mode = #tpu.pipeline_mode<synchronous>, transform_indices = @transform_9, window_bounds = array<i64: 64, 128>}, {pipeline_mode = #tpu.pipeline_mode<synchronous>, transform_indices = @transform_10, window_bounds = array<i64: 1, 128>}, {pipeline_mode = #tpu.pipeline_mode<synchronous>, transform_indices = @transform_11, window_bounds = array<i64: 128, 64>}, {pipeline_mode = #tpu.pipeline_mode<synchronous>, transform_indices = @transform_12, window_bounds = array<i64: 1, 64>}, {pipeline_mode = #tpu.pipeline_mode<synchronous>, transform_indices = @transform_13, window_bounds = array<i64: 1, 64>}, {pipeline_mode = #tpu.pipeline_mode<synchronous>, transform_indices = @transform_14, window_bounds = array<i64: 1, 64>}, {transform_indices = @transform_15, window_bounds = array<i64: 1, 16, 64>}]} {
    %c0 = arith.constant 0 : index
    %c0_0 = arith.constant 0 : index
    %c0_1 = arith.constant 0 : index
    %0 = vector.load %arg1[%c0, %c0_0, %c0_1] : memref<1x16x64xf32, #tpu.memory_space<vmem>>, vector<1x16x64xf32>
    %1 = vector.shape_cast %0 : vector<1x16x64xf32> to vector<16x64xf32>
    %2 = arith.truncf %1 : vector<16x64xf32> to vector<16x64xbf16>
    %c0_2 = arith.constant 0 : index
    %c0_3 = arith.constant 0 : index
    %c0_4 = arith.constant 0 : index
    %3 = vector.load %arg2[%c0_2, %c0_3, %c0_4] : memref<1x1x16xf32, #tpu.memory_space<vmem>>, vector<1x1x16xf32>
    %4 = vector.shape_cast %3 : vector<1x1x16xf32> to vector<1x16xf32>
    %c0_5 = arith.constant 0 : index
    %c0_6 = arith.constant 0 : index
    %5 = vector.load %arg4[%c0_5, %c0_6] : memref<64x192xbf16, #tpu.memory_space<vmem>>, vector<64x192xbf16>
    %cst = arith.constant dense<0.000000e+00> : vector<16x192xf32>
    %6 = tpu.matmul %2, %5, %cst {dimension_numbers = #tpu.dot_dimension_numbers<[1], [0], [0], [1], [0, 0, 1, 1], [], []>} : vector<16x64xbf16>, vector<64x192xbf16>, vector<16x192xf32> -> vector<16x192xf32>
    %c0_7 = arith.constant 0 : index
    %c0_8 = arith.constant 0 : index
    %7 = vector.load %arg5[%c0_7, %c0_8] : memref<1x192xf32, #tpu.memory_space<vmem>>, vector<1x192xf32>
    %8 = vector.broadcast %7 : vector<1x192xf32> to vector<16x192xf32>
    %9 = arith.addf %6, %8 : vector<16x192xf32>
    %10 = vector.extract_strided_slice %9 {offsets = [0, 0], sizes = [16, 64], strides = [1, 1]} : vector<16x192xf32> to vector<16x64xf32>
    %cst_9 = arith.constant 2.500000e-01 : f32
    %11 = vector.broadcast %cst_9 : f32 to vector<16x64xf32>
    %12 = arith.mulf %10, %11 : vector<16x64xf32>
    %13 = arith.truncf %12 : vector<16x64xf32> to vector<16x64xbf16>
    %c0_10 = arith.constant 0 : index
    %c0_11 = arith.constant 0 : index
    %14 = vector.load %arg17[%c0_10, %c0_11] : memref<16x64xbf16, #tpu.memory_space<vmem>>, vector<16x64xbf16>
    tpu.vector_store %arg17[%c0_10, %c0_11], %13 {strides = array<i32>} : memref<16x64xbf16, #tpu.memory_space<vmem>>, vector<16x64xbf16>,
    %15 = vector.extract_strided_slice %9 {offsets = [0, 64], sizes = [16, 64], strides = [1, 1]} : vector<16x192xf32> to vector<16x64xf32>
    %16 = vector.shape_cast %15 : vector<16x64xf32> to vector<16x4x16xf32>
    %17 = tpu.transpose %16, [1, 0, 2] : vector<16x4x16xf32> -> vector<4x16x16xf32>
    %18 = arith.truncf %17 : vector<4x16x16xf32> to vector<4x16x16xbf16>
    %19 = vector.extract_strided_slice %9 {offsets = [0, 128], sizes = [16, 64], strides = [1, 1]} : vector<16x192xf32> to vector<16x64xf32>
    %20 = vector.shape_cast %19 : vector<16x64xf32> to vector<16x4x16xf32>
    %21 = tpu.transpose %20, [1, 0, 2] : vector<16x4x16xf32> -> vector<4x16x16xf32>
    %22 = arith.truncf %21 : vector<4x16x16xf32> to vector<4x16x16xbf16>
    %cst_12 = arith.constant 0.000000e+00 : f32
    %23 = vector.broadcast %cst_12 : f32 to vector<1x16xf32>
    %24 = arith.cmpf ogt, %4, %23 : vector<1x16xf32>
    %cst_13 = arith.constant 0.000000e+00 : f32
    %cst_14 = arith.constant -1.000000e+09 : f32
    %25 = vector.broadcast %cst_13 : f32 to vector<1x16xf32>
    %26 = vector.broadcast %cst_14 : f32 to vector<1x16xf32>
    %27 = arith.select %24, %25, %26 : vector<1x16xi1>, vector<1x16xf32>
    %28 = vector.shape_cast %27 : vector<1x16xf32> to vector<1x1x16xf32>
    %c0_i32 = arith.constant 0 : i32
    %c2_i32 = arith.constant 2 : i32
    %29 = arith.addi %c0_i32, %c2_i32 : i32
    %c1_i32 = arith.constant 1 : i32
    scf.for %arg18 = %c0_i32 to %29 step %c1_i32  : i32 {
      %c8_i32 = arith.constant 8 : i32
      %30 = arith.muli %arg18, %c8_i32 : i32
      %31 = tpu.assume_multiple %30, 8 : i32
      %32 = arith.index_cast %31 : i32 to index
      %c0_16 = arith.constant 0 : index
      %33 = vector.load %arg17[%32, %c0_16] : memref<16x64xbf16, #tpu.memory_space<vmem>>, vector<8x64xbf16>
      %34 = vector.shape_cast %33 : vector<8x64xbf16> to vector<8x4x16xbf16>
      %35 = tpu.transpose %34, [1, 0, 2] : vector<8x4x16xbf16> -> vector<4x8x16xbf16>
      "tpu.trace_start"() <{level = 10 : i32, message = "hqd,hkd->hqk"}> : () -> ()
      %cst_17 = arith.constant dense<0.000000e+00> : vector<4x8x16xf32>
      %36 = tpu.matmul %35, %18, %cst_17 {dimension_numbers = #tpu.dot_dimension_numbers<[2], [2], [1], [1], [0, 0, 0, 1, 1, 1], [0], [0]>} : vector<4x8x16xbf16>, vector<4x16x16xbf16>, vector<4x8x16xf32> -> vector<4x8x16xf32>
      "tpu.trace_stop"() : () -> ()
      %37 = vector.broadcast %28 : vector<1x1x16xf32> to vector<4x8x16xf32>
      %38 = arith.addf %36, %37 : vector<4x8x16xf32>
      %cst_18 = arith.constant dense<0xFF800000> : vector<4x8xf32>
      %39 = vector.multi_reduction <maximumf>, %38, %cst_18 [2] : vector<4x8x16xf32> to vector<4x8xf32>
      %40 = vector.shape_cast %39 : vector<4x8xf32> to vector<4x8x1xf32>
      %41 = vector.broadcast %40 : vector<4x8x1xf32> to vector<4x8x16xf32>
      %42 = arith.subf %38, %41 : vector<4x8x16xf32>
      %43 = math.exp %42 : vector<4x8x16xf32>
      %cst_19 = arith.constant dense<0.000000e+00> : vector<4x8xf32>
      %44 = vector.multi_reduction <add>, %43, %cst_19 [2] : vector<4x8x16xf32> to vector<4x8xf32>
      %45 = vector.shape_cast %44 : vector<4x8xf32> to vector<4x8x1xf32>
      %46 = vector.broadcast %45 : vector<4x8x1xf32> to vector<4x8x16xf32>
      %47 = arith.divf %43, %46 : vector<4x8x16xf32>
      %48 = arith.truncf %47 : vector<4x8x16xf32> to vector<4x8x16xbf16>
      "tpu.trace_start"() <{level = 10 : i32, message = "hqk,hkd->hqd"}> : () -> ()
      %cst_20 = arith.constant dense<0.000000e+00> : vector<4x8x16xf32>
      %49 = tpu.matmul %48, %22, %cst_20 {dimension_numbers = #tpu.dot_dimension_numbers<[2], [1], [1], [2], [0, 0, 0, 1, 1, 2], [0], [0]>} : vector<4x8x16xbf16>, vector<4x16x16xbf16>, vector<4x8x16xf32> -> vector<4x8x16xf32>
      "tpu.trace_stop"() : () -> ()
      %50 = tpu.transpose %49, [1, 0, 2] : vector<4x8x16xf32> -> vector<8x4x16xf32>
      %51 = vector.shape_cast %50 : vector<8x4x16xf32> to vector<8x64xf32>
      %52 = arith.truncf %51 : vector<8x64xf32> to vector<8x64xbf16>
      %c0_21 = arith.constant 0 : index
      %c0_22 = arith.constant 0 : index
      %53 = vector.load %arg6[%c0_21, %c0_22] : memref<64x64xbf16, #tpu.memory_space<vmem>>, vector<64x64xbf16>
      %cst_23 = arith.constant dense<0.000000e+00> : vector<8x64xf32>
      %54 = tpu.matmul %52, %53, %cst_23 {dimension_numbers = #tpu.dot_dimension_numbers<[1], [0], [0], [1], [0, 0, 1, 1], [], []>} : vector<8x64xbf16>, vector<64x64xbf16>, vector<8x64xf32> -> vector<8x64xf32>
      %c0_24 = arith.constant 0 : index
      %c0_25 = arith.constant 0 : index
      %55 = vector.load %arg7[%c0_24, %c0_25] : memref<1x64xf32, #tpu.memory_space<vmem>>, vector<1x64xf32>
      %56 = vector.broadcast %55 : vector<1x64xf32> to vector<8x64xf32>
      %57 = arith.addf %54, %56 : vector<8x64xf32>
      %c0_26 = arith.constant 0 : index
      %58 = arith.index_cast %31 : i32 to index
      %c0_27 = arith.constant 0 : index
      %59 = vector.load %arg1[%c0_26, %58, %c0_27] : memref<1x16x64xf32, #tpu.memory_space<vmem>>, vector<1x8x64xf32>
      %60 = vector.shape_cast %59 : vector<1x8x64xf32> to vector<8x64xf32>
      %c0_28 = arith.constant 0 : index
      %61 = arith.index_cast %31 : i32 to index
      %c0_29 = arith.constant 0 : index
      %62 = vector.load %arg3[%c0_28, %61, %c0_29] : memref<1x16x1xf32, #tpu.memory_space<vmem>>, vector<1x8x1xf32>
      %63 = vector.shape_cast %62 : vector<1x8x1xf32> to vector<8x1xf32>
      %64 = arith.addf %60, %57 : vector<8x64xf32>
      %c0_30 = arith.constant 0 : index
      %c0_31 = arith.constant 0 : index
      %65 = vector.load %arg8[%c0_30, %c0_31] : memref<1x64xf32, #tpu.memory_space<vmem>>, vector<1x64xf32>
      %c0_32 = arith.constant 0 : index
      %c0_33 = arith.constant 0 : index
      %66 = vector.load %arg9[%c0_32, %c0_33] : memref<1x64xf32, #tpu.memory_space<vmem>>, vector<1x64xf32>
      %cst_34 = arith.constant dense<0.000000e+00> : vector<8xf32>
      %67 = vector.multi_reduction <add>, %64, %cst_34 [1] : vector<8x64xf32> to vector<8xf32>
      %68 = vector.shape_cast %67 : vector<8xf32> to vector<8x1xf32>
      %cst_35 = arith.constant 6.400000e+01 : f32
      %69 = vector.broadcast %cst_35 : f32 to vector<8x1xf32>
      %70 = arith.divf %68, %69 : vector<8x1xf32>
      %71 = vector.broadcast %70 : vector<8x1xf32> to vector<8x64xf32>
      %72 = arith.subf %64, %71 : vector<8x64xf32>
      %73 = arith.mulf %72, %72 : vector<8x64xf32>
      %cst_36 = arith.constant dense<0.000000e+00> : vector<8xf32>
      %74 = vector.multi_reduction <add>, %73, %cst_36 [1] : vector<8x64xf32> to vector<8xf32>
      %75 = vector.shape_cast %74 : vector<8xf32> to vector<8x1xf32>
      %cst_37 = arith.constant 6.400000e+01 : f32
      %76 = vector.broadcast %cst_37 : f32 to vector<8x1xf32>
      %77 = arith.divf %75, %76 : vector<8x1xf32>
      %cst_38 = arith.constant 9.99999974E-6 : f32
      %78 = vector.broadcast %cst_38 : f32 to vector<8x1xf32>
      %79 = arith.addf %77, %78 : vector<8x1xf32>
      %80 = math.rsqrt %79 : vector<8x1xf32>
      %81 = vector.broadcast %80 : vector<8x1xf32> to vector<8x64xf32>
      %82 = arith.mulf %72, %81 : vector<8x64xf32>
      %83 = vector.broadcast %65 : vector<1x64xf32> to vector<8x64xf32>
      %84 = arith.mulf %82, %83 : vector<8x64xf32>
      %85 = vector.broadcast %66 : vector<1x64xf32> to vector<8x64xf32>
      %86 = arith.addf %84, %85 : vector<8x64xf32>
      %87 = vector.broadcast %63 : vector<8x1xf32> to vector<8x64xf32>
      %88 = arith.mulf %86, %87 : vector<8x64xf32>
      %89 = arith.truncf %88 : vector<8x64xf32> to vector<8x64xbf16>
      %c0_39 = arith.constant 0 : index
      %c0_40 = arith.constant 0 : index
      %90 = vector.load %arg10[%c0_39, %c0_40] : memref<64x128xbf16, #tpu.memory_space<vmem>>, vector<64x128xbf16>
      %cst_41 = arith.constant dense<0.000000e+00> : vector<8x128xf32>
      %91 = tpu.matmul %89, %90, %cst_41 {dimension_numbers = #tpu.dot_dimension_numbers<[1], [0], [0], [1], [0, 0, 1, 1], [], []>} : vector<8x64xbf16>, vector<64x128xbf16>, vector<8x128xf32> -> vector<8x128xf32>
      %c0_42 = arith.constant 0 : index
      %c0_43 = arith.constant 0 : index
      %92 = vector.load %arg11[%c0_42, %c0_43] : memref<1x128xf32, #tpu.memory_space<vmem>>, vector<1x128xf32>
      %93 = vector.broadcast %92 : vector<1x128xf32> to vector<8x128xf32>
      %94 = arith.addf %91, %93 : vector<8x128xf32>
      %cst_44 = arith.constant 0.000000e+00 : f32
      %95 = vector.broadcast %cst_44 : f32 to vector<8x128xf32>
      %96 = arith.maximumf %94, %95 : vector<8x128xf32>
      %97 = arith.truncf %96 : vector<8x128xf32> to vector<8x128xbf16>
      %c0_45 = arith.constant 0 : index
      %c0_46 = arith.constant 0 : index
      %98 = vector.load %arg12[%c0_45, %c0_46] : memref<128x64xbf16, #tpu.memory_space<vmem>>, vector<128x64xbf16>
      %cst_47 = arith.constant dense<0.000000e+00> : vector<8x64xf32>
      %99 = tpu.matmul %97, %98, %cst_47 {dimension_numbers = #tpu.dot_dimension_numbers<[1], [0], [0], [1], [0, 0, 1, 1], [], []>} : vector<8x128xbf16>, vector<128x64xbf16>, vector<8x64xf32> -> vector<8x64xf32>
      %c0_48 = arith.constant 0 : index
      %c0_49 = arith.constant 0 : index
      %100 = vector.load %arg13[%c0_48, %c0_49] : memref<1x64xf32, #tpu.memory_space<vmem>>, vector<1x64xf32>
      %101 = vector.broadcast %100 : vector<1x64xf32> to vector<8x64xf32>
      %102 = arith.addf %99, %101 : vector<8x64xf32>
      %103 = arith.addf %88, %102 : vector<8x64xf32>
      %c0_50 = arith.constant 0 : index
      %c0_51 = arith.constant 0 : index
      %104 = vector.load %arg14[%c0_50, %c0_51] : memref<1x64xf32, #tpu.memory_space<vmem>>, vector<1x64xf32>
      %c0_52 = arith.constant 0 : index
      %c0_53 = arith.constant 0 : index
      %105 = vector.load %arg15[%c0_52, %c0_53] : memref<1x64xf32, #tpu.memory_space<vmem>>, vector<1x64xf32>
      %cst_54 = arith.constant dense<0.000000e+00> : vector<8xf32>
      %106 = vector.multi_reduction <add>, %103, %cst_54 [1] : vector<8x64xf32> to vector<8xf32>
      %107 = vector.shape_cast %106 : vector<8xf32> to vector<8x1xf32>
      %cst_55 = arith.constant 6.400000e+01 : f32
      %108 = vector.broadcast %cst_55 : f32 to vector<8x1xf32>
      %109 = arith.divf %107, %108 : vector<8x1xf32>
      %110 = vector.broadcast %109 : vector<8x1xf32> to vector<8x64xf32>
      %111 = arith.subf %103, %110 : vector<8x64xf32>
      %112 = arith.mulf %111, %111 : vector<8x64xf32>
      %cst_56 = arith.constant dense<0.000000e+00> : vector<8xf32>
      %113 = vector.multi_reduction <add>, %112, %cst_56 [1] : vector<8x64xf32> to vector<8xf32>
      %114 = vector.shape_cast %113 : vector<8xf32> to vector<8x1xf32>
      %cst_57 = arith.constant 6.400000e+01 : f32
      %115 = vector.broadcast %cst_57 : f32 to vector<8x1xf32>
      %116 = arith.divf %114, %115 : vector<8x1xf32>
      %cst_58 = arith.constant 9.99999974E-6 : f32
      %117 = vector.broadcast %cst_58 : f32 to vector<8x1xf32>
      %118 = arith.addf %116, %117 : vector<8x1xf32>
      %119 = math.rsqrt %118 : vector<8x1xf32>
      %120 = vector.broadcast %119 : vector<8x1xf32> to vector<8x64xf32>
      %121 = arith.mulf %111, %120 : vector<8x64xf32>
      %122 = vector.broadcast %104 : vector<1x64xf32> to vector<8x64xf32>
      %123 = arith.mulf %121, %122 : vector<8x64xf32>
      %124 = vector.broadcast %105 : vector<1x64xf32> to vector<8x64xf32>
      %125 = arith.addf %123, %124 : vector<8x64xf32>
      %126 = vector.broadcast %63 : vector<8x1xf32> to vector<8x64xf32>
      %127 = arith.mulf %125, %126 : vector<8x64xf32>
      %c0_59 = arith.constant 0 : index
      %128 = arith.index_cast %31 : i32 to index
      %c0_60 = arith.constant 0 : index
      %129 = vector.load %arg16[%c0_59, %128, %c0_60] : memref<1x16x64xf32, #tpu.memory_space<vmem>>, vector<1x8x64xf32>
      %130 = vector.shape_cast %129 : vector<1x8x64xf32> to vector<8x64xf32>
      %131 = vector.shape_cast %127 : vector<8x64xf32> to vector<1x8x64xf32>
      tpu.vector_store %arg16[%c0_59, %128, %c0_60], %131 {strides = array<i32>} : memref<1x16x64xf32, #tpu.memory_space<vmem>>, vector<1x8x64xf32>,
    }
    %c2_i32_15 = arith.constant 2 : i32
    return
  }
  func.func @transform_0(%arg0: i32) -> (i32, i32, i32) {
    %c0_i32 = arith.constant 0 : i32
    %c0_i32_0 = arith.constant 0 : i32
    %c0_i32_1 = arith.constant 0 : i32
    return %arg0, %c0_i32, %c0_i32_0 : i32, i32, i32
  }
  func.func @transform_1(%arg0: i32) -> (i32, i32, i32) {
    %c0_i32 = arith.constant 0 : i32
    %c0_i32_0 = arith.constant 0 : i32
    %c0_i32_1 = arith.constant 0 : i32
    return %arg0, %c0_i32, %c0_i32_0 : i32, i32, i32
  }
  func.func @transform_2(%arg0: i32) -> (i32, i32, i32) {
    %c0_i32 = arith.constant 0 : i32
    %c0_i32_0 = arith.constant 0 : i32
    %c0_i32_1 = arith.constant 0 : i32
    return %arg0, %c0_i32, %c0_i32_0 : i32, i32, i32
  }
  func.func @transform_3(%arg0: i32) -> (i32, i32) {
    %c0_i32 = arith.constant 0 : i32
    %c0_i32_0 = arith.constant 0 : i32
    %c0_i32_1 = arith.constant 0 : i32
    return %c0_i32, %c0_i32_0 : i32, i32
  }
  func.func @transform_4(%arg0: i32) -> (i32, i32) {
    %c0_i32 = arith.constant 0 : i32
    %c0_i32_0 = arith.constant 0 : i32
    %c0_i32_1 = arith.constant 0 : i32
    return %c0_i32, %c0_i32_0 : i32, i32
  }
  func.func @transform_5(%arg0: i32) -> (i32, i32) {
    %c0_i32 = arith.constant 0 : i32
    %c0_i32_0 = arith.constant 0 : i32
    %c0_i32_1 = arith.constant 0 : i32
    return %c0_i32, %c0_i32_0 : i32, i32
  }
  func.func @transform_6(%arg0: i32) -> (i32, i32) {
    %c0_i32 = arith.constant 0 : i32
    %c0_i32_0 = arith.constant 0 : i32
    %c0_i32_1 = arith.constant 0 : i32
    return %c0_i32, %c0_i32_0 : i32, i32
  }
  func.func @transform_7(%arg0: i32) -> (i32, i32) {
    %c0_i32 = arith.constant 0 : i32
    %c0_i32_0 = arith.constant 0 : i32
    %c0_i32_1 = arith.constant 0 : i32
    return %c0_i32, %c0_i32_0 : i32, i32
  }
  func.func @transform_8(%arg0: i32) -> (i32, i32) {
    %c0_i32 = arith.constant 0 : i32
    %c0_i32_0 = arith.constant 0 : i32
    %c0_i32_1 = arith.constant 0 : i32
    return %c0_i32, %c0_i32_0 : i32, i32
  }
  func.func @transform_9(%arg0: i32) -> (i32, i32) {
    %c0_i32 = arith.constant 0 : i32
    %c0_i32_0 = arith.constant 0 : i32
    %c0_i32_1 = arith.constant 0 : i32
    return %c0_i32, %c0_i32_0 : i32, i32
  }
  func.func @transform_10(%arg0: i32) -> (i32, i32) {
    %c0_i32 = arith.constant 0 : i32
    %c0_i32_0 = arith.constant 0 : i32
    %c0_i32_1 = arith.constant 0 : i32
    return %c0_i32, %c0_i32_0 : i32, i32
  }
  func.func @transform_11(%arg0: i32) -> (i32, i32) {
    %c0_i32 = arith.constant 0 : i32
    %c0_i32_0 = arith.constant 0 : i32
    %c0_i32_1 = arith.constant 0 : i32
    return %c0_i32, %c0_i32_0 : i32, i32
  }
  func.func @transform_12(%arg0: i32) -> (i32, i32) {
    %c0_i32 = arith.constant 0 : i32
    %c0_i32_0 = arith.constant 0 : i32
    %c0_i32_1 = arith.constant 0 : i32
    return %c0_i32, %c0_i32_0 : i32, i32
  }
  func.func @transform_13(%arg0: i32) -> (i32, i32) {
    %c0_i32 = arith.constant 0 : i32
    %c0_i32_0 = arith.constant 0 : i32
    %c0_i32_1 = arith.constant 0 : i32
    return %c0_i32, %c0_i32_0 : i32, i32
  }
  func.func @transform_14(%arg0: i32) -> (i32, i32) {
    %c0_i32 = arith.constant 0 : i32
    %c0_i32_0 = arith.constant 0 : i32
    %c0_i32_1 = arith.constant 0 : i32
    return %c0_i32, %c0_i32_0 : i32, i32
  }
  func.func @transform_15(%arg0: i32) -> (i32, i32, i32) {
    %c0_i32 = arith.constant 0 : i32
    %c0_i32_0 = arith.constant 0 : i32
    %c0_i32_1 = arith.constant 0 : i32
    return %arg0, %c0_i32, %c0_i32_0 : i32, i32, i32
  }
}

</mosaic_0001>

<llo_original>
// kernel: tpu_custom_call.1
$region0: #{tpu_custom_call.1}
  #allocation0 [shape = 'u32[]', space=smem, size = 0x4, offset = 0x4, fixed_abs, tag = 'smem constant byte address 0x4 - core index']
  #allocation1 [shape = 'u32[72,128]{1,0:T(1,128)}', space=vmem, size = 0x9000, scoped, tag = 'internal scratch']
  #allocation2 [shape = 'bf16[16,64]{1,0:T(8,128)(2,1)}', space=vmem, size = 0x1000, scoped, tag = 'scratch operand']
  %s0 = inlined_call_operand.vmem [shape: f32[2,16,64], index: 0, kind: input, shape index: {}]
  %s1 = inlined_call_operand.vmem [shape: f32[2,1,16], index: 1, kind: input, shape index: {}]
  %s2 = inlined_call_operand.vmem [shape: f32[2,16,1], index: 2, kind: input, shape index: {}]
  %s3 = inlined_call_operand.vmem [shape: bf16[64,192], index: 3, kind: input, shape index: {}]
  %s4 = inlined_call_operand.vmem [shape: f32[1,192], index: 4, kind: input, shape index: {}]
  %s5 = inlined_call_operand.hbm [shape: bf16[64,64], index: 5, kind: input, shape index: {}]
  %s6 = inlined_call_operand.vmem [shape: f32[1,64], index: 6, kind: input, shape index: {}]
  %s7 = inlined_call_operand.vmem [shape: f32[1,64], index: 7, kind: input, shape index: {}]
  %s8 = inlined_call_operand.vmem [shape: f32[1,64], index: 8, kind: input, shape index: {}]
  %s9 = inlined_call_operand.hbm [shape: bf16[64,128], index: 9, kind: input, shape index: {}]
  %s10 = inlined_call_operand.vmem [shape: f32[1,128], index: 10, kind: input, shape index: {}]
  %s11 = inlined_call_operand.vmem [shape: bf16[128,64], index: 11, kind: input, shape index: {}]
  %s12 = inlined_call_operand.vmem [shape: f32[1,64], index: 12, kind: input, shape index: {}]
  %s13 = inlined_call_operand.vmem [shape: f32[1,64], index: 13, kind: input, shape index: {}]
  %s14 = inlined_call_operand.vmem [shape: f32[1,64], index: 14, kind: input, shape index: {}]
  %s15 = inlined_call_operand.hbm [shape: f32[2,16,64], index: 15, kind: output, shape index: {}]
  %s16 = sld [smem:[#allocation0]]
  $region108: #{tpu_custom_call.1} parent=0
    _
  %s18 = ssub.s32 1, %s16
  %s19 = scalar_select 0, %s18, %s16
  $region1: #{tpu_custom_call.1} parent=0
    #allocation3 [shape = 'u8[16384]{0}', space=vmem, size = 0x4000, scoped, tag = 'input window, operand 5, single buffered']
    #allocation4 [shape = 's32[2]{0}', space=sflag, size = 0x8, scoped, tag = 'scoped memory for tpu_custom_call.1']
    #allocation5 [shape = 's32[2]{0}', space=sflag, size = 0x8, scoped, tag = 'scoped memory for tpu_custom_call.1']
    #allocation6 [shape = 'u8[16384]{0}', space=vmem, size = 0x4000, scoped, tag = 'input window, operand 9, single buffered']
    #allocation7 [shape = 's32[1]{0}', space=sflag, size = 0x4, scoped, tag = 'scoped memory for tpu_custom_call.1']
    #allocation8 [shape = 'u8[16384]{0}', space=vmem, size = 0x4000, scoped, tag = 'output window, operand 0']
    %20 = vsyncpa [#allocation4], 0
    %21 = vsyncpa [#allocation7], 0
    %22 = vsyncpa [#allocation5], 0
    %s23 = scalar_lea.sflag [#allocation5], 1
    %24 = vsyncpa %s23, 0
    loop: start=0, step=1, limit=4
    $region2: #{tpu_custom_call.1} parent=1 // loop_pre_header
      _
    $region3: #{tpu_custom_call.1} parent=1 // loop_header
      %s26 = sphi 0, %s30
      %p27 = scmp.ge.s32.totalorder %s26, 4
      %s36 = sphi 0, %s38
      %s39 = sphi 0, %s36
      %s40 = sphi 0, %s39
      %s56 = sphi 0, %s40
      %s62 = sphi 0, %s64
      %s65 = sphi 0, %s62
      %s66 = sphi 0, %s65
      %s82 = sphi 0, %s66
      %s88 = sphi 0, %s90
      %s91 = sphi 0, %s88
      %s92 = sphi 0, %s91
      %s108 = sphi 0, %s92
      %s112 = sphi 0, %s112
      %s114 = sphi 0, %s112
      %s115 = sphi 0, %s114
      %s129 = sphi 0, %s115
      %s133 = sphi 0, %s133
      %s135 = sphi 0, %s133
      %s136 = sphi 0, %s135
      %s150 = sphi 0, %s136
      %s154 = sphi 0, %s154
      %s156 = sphi 0, %s154
      %s157 = sphi 0, %s156
      %s171 = sphi 0, %s157
      %s175 = sphi 0, %s175
      %s177 = sphi 0, %s175
      %s178 = sphi 0, %s177
      %s192 = sphi 0, %s178
      %s196 = sphi 0, %s196
      %s198 = sphi 0, %s196
      %s199 = sphi 0, %s198
      %s213 = sphi 0, %s199
      %s217 = sphi 0, %s217
      %s219 = sphi 0, %s217
      %s220 = sphi 0, %s219
      %s234 = sphi 0, %s220
      %s238 = sphi 0, %s238
      %s240 = sphi 0, %s238
      %s241 = sphi 0, %s240
      %s255 = sphi 0, %s241
      %s259 = sphi 0, %s259
      %s261 = sphi 0, %s259
      %s262 = sphi 0, %s261
      %s276 = sphi 0, %s262
      %s280 = sphi 0, %s280
      %s282 = sphi 0, %s280
      %s283 = sphi 0, %s282
      %s297 = sphi 0, %s283
      %s301 = sphi 0, %s301
      %s303 = sphi 0, %s301
      %s304 = sphi 0, %s303
      %s318 = sphi 0, %s304
      %s322 = sphi 0, %s322
      %s324 = sphi 0, %s322
      %s325 = sphi 0, %s324
      %s339 = sphi 0, %s325
      %s343 = sphi 0, %s343
      %s345 = sphi 0, %s343
      %s346 = sphi 0, %s345
      %s360 = sphi 0, %s346
      %s366 = sphi 0, %s368
      %s369 = sphi 0, %s366
      %s370 = sphi 0, %s369
      %s386 = sphi 0, %s370
    $region4: #{tpu_custom_call.1} parent=1 // loop_header_branch
      %29 = sbr.rel (%p27) target = $region8
    $region5: #{tpu_custom_call.1} parent=1 // loop_body
      %s31 = ssub.s32 %s26, 1
      %s32 = ssub.s32 %s26, 2
      %s33 = sadd.s32 %s26, 1
      %s34 = ssub.s32 %s26, %s33
      %p35 = scmp.eq.s32.totalorder %s34, 0
      %s37 = sadd.s32 %s36, 1
      %s38 = scalar_select %p35, %s36, %s37
      %p41 = pneg %p35
      %p42 = scmp.eq.s32.totalorder %s26, 1
      %p43 = por %p41, %p42
      %p44 = scmp.ne.s32.totalorder %s36, %s39
      %p45 = scmp.eq.s32.totalorder %s26, 0
      %p46 = por %p44, %p45
      %p47 = scmp.ne.s32.totalorder %s36, %s39
      %p48 = scmp.eq.s32.totalorder %s31, 1
      %p49 = por %p47, %p48
      %p50 = scmp.ne.s32.totalorder %s39, %s40
      %p51 = scmp.eq.s32.totalorder %s31, 0
      %p52 = por %p50, %p51
      %p53 = scmp.ne.s32.totalorder %s39, %s40
      %p54 = scmp.eq.s32.totalorder %s32, 1
      %p55 = por %p53, %p54
      %p57 = scmp.ne.s32.totalorder %s40, %s56
      %p58 = scmp.eq.s32.totalorder %s32, 0
      %p59 = por %p57, %p58
      %s60 = ssub.s32 %s26, %s33
      %p61 = scmp.eq.s32.totalorder %s60, 0
      %s63 = sadd.s32 %s62, 1
      %s64 = scalar_select %p61, %s62, %s63
      %p67 = pneg %p61
      %p68 = scmp.eq.s32.totalorder %s26, 1
      %p69 = por %p67, %p68
      %p70 = scmp.ne.s32.totalorder %s62, %s65
      %p71 = scmp.eq.s32.totalorder %s26, 0
      %p72 = por %p70, %p71
      %p73 = scmp.ne.s32.totalorder %s62, %s65
      %p74 = scmp.eq.s32.totalorder %s31, 1
      %p75 = por %p73, %p74
      %p76 = scmp.ne.s32.totalorder %s65, %s66
      %p77 = scmp.eq.s32.totalorder %s31, 0
      %p78 = por %p76, %p77
      %p79 = scmp.ne.s32.totalorder %s65, %s66
      %p80 = scmp.eq.s32.totalorder %s32, 1
      %p81 = por %p79, %p80
      %p83 = scmp.ne.s32.totalorder %s66, %s82
      %p84 = scmp.eq.s32.totalorder %s32, 0
      %p85 = por %p83, %p84
      %s86 = ssub.s32 %s26, %s33
      %p87 = scmp.eq.s32.totalorder %s86, 0
      %s89 = sadd.s32 %s88, 1
      %s90 = scalar_select %p87, %s88, %s89
      %p93 = pneg %p87
      %p94 = scmp.eq.s32.totalorder %s26, 1
      %p95 = por %p93, %p94
      %p96 = scmp.ne.s32.totalorder %s88, %s91
      %p97 = scmp.eq.s32.totalorder %s26, 0
      %p98 = por %p96, %p97
      %p99 = scmp.ne.s32.totalorder %s88, %s91
      %p100 = scmp.eq.s32.totalorder %s31, 1
      %p101 = por %p99, %p100
      %p102 = scmp.ne.s32.totalorder %s91, %s92
      %p103 = scmp.eq.s32.totalorder %s31, 0
      %p104 = por %p102, %p103
      %p105 = scmp.ne.s32.totalorder %s91, %s92
      %p106 = scmp.eq.s32.totalorder %s32, 1
      %p107 = por %p105, %p106
      %p109 = scmp.ne.s32.totalorder %s92, %s108
      %p110 = scmp.eq.s32.totalorder %s32, 0
      %p111 = por %p109, %p110
      %s113 = sadd.s32 %s112, 1
      %p116 = scmp.eq.s32.totalorder %s26, 1
      %p117 = scmp.ne.s32.totalorder %s112, %s114
      %p118 = scmp.eq.s32.totalorder %s26, 0
      %p119 = por %p117, %p118
      %p120 = scmp.ne.s32.totalorder %s112, %s114
      %p121 = scmp.eq.s32.totalorder %s31, 1
      %p122 = por %p120, %p121
      %p123 = scmp.ne.s32.totalorder %s114, %s115
      %p124 = scmp.eq.s32.totalorder %s31, 0
      %p125 = por %p123, %p124
      %p126 = scmp.ne.s32.totalorder %s114, %s115
      %p127 = scmp.eq.s32.totalorder %s32, 1
      %p128 = por %p126, %p127
      %p130 = scmp.ne.s32.totalorder %s115, %s129
      %p131 = scmp.eq.s32.totalorder %s32, 0
      %p132 = por %p130, %p131
      %s134 = sadd.s32 %s133, 1
      %p137 = scmp.eq.s32.totalorder %s26, 1
      %p138 = scmp.ne.s32.totalorder %s133, %s135
      %p139 = scmp.eq.s32.totalorder %s26, 0
      %p140 = por %p138, %p139
      %p141 = scmp.ne.s32.totalorder %s133, %s135
      %p142 = scmp.eq.s32.totalorder %s31, 1
      %p143 = por %p141, %p142
      %p144 = scmp.ne.s32.totalorder %s135, %s136
      %p145 = scmp.eq.s32.totalorder %s31, 0
      %p146 = por %p144, %p145
      %p147 = scmp.ne.s32.totalorder %s135, %s136
      %p148 = scmp.eq.s32.totalorder %s32, 1
      %p149 = por %p147, %p148
      %p151 = scmp.ne.s32.totalorder %s136, %s150
      %p152 = scmp.eq.s32.totalorder %s32, 0
      %p153 = por %p151, %p152
      %s155 = sadd.s32 %s154, 1
      %p158 = scmp.eq.s32.totalorder %s26, 1
      %p159 = scmp.ne.s32.totalorder %s154, %s156
      %p160 = scmp.eq.s32.totalorder %s26, 0
      %p161 = por %p159, %p160
      %p162 = scmp.ne.s32.totalorder %s154, %s156
      %p163 = scmp.eq.s32.totalorder %s31, 1
      %p164 = por %p162, %p163
      %p165 = scmp.ne.s32.totalorder %s156, %s157
      %p166 = scmp.eq.s32.totalorder %s31, 0
      %p167 = por %p165, %p166
      %p168 = scmp.ne.s32.totalorder %s156, %s157
      %p169 = scmp.eq.s32.totalorder %s32, 1
      %p170 = por %p168, %p169
      %p172 = scmp.ne.s32.totalorder %s157, %s171
      %p173 = scmp.eq.s32.totalorder %s32, 0
      %p174 = por %p172, %p173
      %s176 = sadd.s32 %s175, 1
      %p179 = scmp.eq.s32.totalorder %s26, 1
      %p180 = scmp.ne.s32.totalorder %s175, %s177
      %p181 = scmp.eq.s32.totalorder %s26, 0
      %p182 = por %p180, %p181
      %p183 = scmp.ne.s32.totalorder %s175, %s177
      %p184 = scmp.eq.s32.totalorder %s31, 1
      %p185 = por %p183, %p184
      %p186 = scmp.ne.s32.totalorder %s177, %s178
      %p187 = scmp.eq.s32.totalorder %s31, 0
      %p188 = por %p186, %p187
      %p189 = scmp.ne.s32.totalorder %s177, %s178
      %p190 = scmp.eq.s32.totalorder %s32, 1
      %p191 = por %p189, %p190
      %p193 = scmp.ne.s32.totalorder %s178, %s192
      %p194 = scmp.eq.s32.totalorder %s32, 0
      %p195 = por %p193, %p194
      %s197 = sadd.s32 %s196, 1
      %p200 = scmp.eq.s32.totalorder %s26, 1
      %p201 = scmp.ne.s32.totalorder %s196, %s198
      %p202 = scmp.eq.s32.totalorder %s26, 0
      %p203 = por %p201, %p202
      %p204 = scmp.ne.s32.totalorder %s196, %s198
      %p205 = scmp.eq.s32.totalorder %s31, 1
      %p206 = por %p204, %p205
      %p207 = scmp.ne.s32.totalorder %s198, %s199
      %p208 = scmp.eq.s32.totalorder %s31, 0
      %p209 = por %p207, %p208
      %p210 = scmp.ne.s32.totalorder %s198, %s199
      %p211 = scmp.eq.s32.totalorder %s32, 1
      %p212 = por %p210, %p211
      %p214 = scmp.ne.s32.totalorder %s199, %s213
      %p215 = scmp.eq.s32.totalorder %s32, 0
      %p216 = por %p214, %p215
      %s218 = sadd.s32 %s217, 1
      %p221 = scmp.eq.s32.totalorder %s26, 1
      %p222 = scmp.ne.s32.totalorder %s217, %s219
      %p223 = scmp.eq.s32.totalorder %s26, 0
      %p224 = por %p222, %p223
      %p225 = scmp.ne.s32.totalorder %s217, %s219
      %p226 = scmp.eq.s32.totalorder %s31, 1
      %p227 = por %p225, %p226
      %p228 = scmp.ne.s32.totalorder %s219, %s220
      %p229 = scmp.eq.s32.totalorder %s31, 0
      %p230 = por %p228, %p229
      %p231 = scmp.ne.s32.totalorder %s219, %s220
      %p232 = scmp.eq.s32.totalorder %s32, 1
      %p233 = por %p231, %p232
      %p235 = scmp.ne.s32.totalorder %s220, %s234
      %p236 = scmp.eq.s32.totalorder %s32, 0
      %p237 = por %p235, %p236
      %s239 = sadd.s32 %s238, 1
      %p242 = scmp.eq.s32.totalorder %s26, 1
      %p243 = scmp.ne.s32.totalorder %s238, %s240
      %p244 = scmp.eq.s32.totalorder %s26, 0
      %p245 = por %p243, %p244
      %p246 = scmp.ne.s32.totalorder %s238, %s240
      %p247 = scmp.eq.s32.totalorder %s31, 1
      %p248 = por %p246, %p247
      %p249 = scmp.ne.s32.totalorder %s240, %s241
      %p250 = scmp.eq.s32.totalorder %s31, 0
      %p251 = por %p249, %p250
      %p252 = scmp.ne.s32.totalorder %s240, %s241
      %p253 = scmp.eq.s32.totalorder %s32, 1
      %p254 = por %p252, %p253
      %p256 = scmp.ne.s32.totalorder %s241, %s255
      %p257 = scmp.eq.s32.totalorder %s32, 0
      %p258 = por %p256, %p257
      %s260 = sadd.s32 %s259, 1
      %p263 = scmp.eq.s32.totalorder %s26, 1
      %p264 = scmp.ne.s32.totalorder %s259, %s261
      %p265 = scmp.eq.s32.totalorder %s26, 0
      %p266 = por %p264, %p265
      %p267 = scmp.ne.s32.totalorder %s259, %s261
      %p268 = scmp.eq.s32.totalorder %s31, 1
      %p269 = por %p267, %p268
      %p270 = scmp.ne.s32.totalorder %s261, %s262
      %p271 = scmp.eq.s32.totalorder %s31, 0
      %p272 = por %p270, %p271
      %p273 = scmp.ne.s32.totalorder %s261, %s262
      %p274 = scmp.eq.s32.totalorder %s32, 1
      %p275 = por %p273, %p274
      %p277 = scmp.ne.s32.totalorder %s262, %s276
      %p278 = scmp.eq.s32.totalorder %s32, 0
      %p279 = por %p277, %p278
      %s281 = sadd.s32 %s280, 1
      %p284 = scmp.eq.s32.totalorder %s26, 1
      %p285 = scmp.ne.s32.totalorder %s280, %s282
      %p286 = scmp.eq.s32.totalorder %s26, 0
      %p287 = por %p285, %p286
      %p288 = scmp.ne.s32.totalorder %s280, %s282
      %p289 = scmp.eq.s32.totalorder %s31, 1
      %p290 = por %p288, %p289
      %p291 = scmp.ne.s32.totalorder %s282, %s283
      %p292 = scmp.eq.s32.totalorder %s31, 0
      %p293 = por %p291, %p292
      %p294 = scmp.ne.s32.totalorder %s282, %s283
      %p295 = scmp.eq.s32.totalorder %s32, 1
      %p296 = por %p294, %p295
      %p298 = scmp.ne.s32.totalorder %s283, %s297
      %p299 = scmp.eq.s32.totalorder %s32, 0
      %p300 = por %p298, %p299
      %s302 = sadd.s32 %s301, 1
      %p305 = scmp.eq.s32.totalorder %s26, 1
      %p306 = scmp.ne.s32.totalorder %s301, %s303
      %p307 = scmp.eq.s32.totalorder %s26, 0
      %p308 = por %p306, %p307
      %p309 = scmp.ne.s32.totalorder %s301, %s303
      %p310 = scmp.eq.s32.totalorder %s31, 1
      %p311 = por %p309, %p310
      %p312 = scmp.ne.s32.totalorder %s303, %s304
      %p313 = scmp.eq.s32.totalorder %s31, 0
      %p314 = por %p312, %p313
      %p315 = scmp.ne.s32.totalorder %s303, %s304
      %p316 = scmp.eq.s32.totalorder %s32, 1
      %p317 = por %p315, %p316
      %p319 = scmp.ne.s32.totalorder %s304, %s318
      %p320 = scmp.eq.s32.totalorder %s32, 0
      %p321 = por %p319, %p320
      %s323 = sadd.s32 %s322, 1
      %p326 = scmp.eq.s32.totalorder %s26, 1
      %p327 = scmp.ne.s32.totalorder %s322, %s324
      %p328 = scmp.eq.s32.totalorder %s26, 0
      %p329 = por %p327, %p328
      %p330 = scmp.ne.s32.totalorder %s322, %s324
      %p331 = scmp.eq.s32.totalorder %s31, 1
      %p332 = por %p330, %p331
      %p333 = scmp.ne.s32.totalorder %s324, %s325
      %p334 = scmp.eq.s32.totalorder %s31, 0
      %p335 = por %p333, %p334
      %p336 = scmp.ne.s32.totalorder %s324, %s325
      %p337 = scmp.eq.s32.totalorder %s32, 1
      %p338 = por %p336, %p337
      %p340 = scmp.ne.s32.totalorder %s325, %s339
      %p341 = scmp.eq.s32.totalorder %s32, 0
      %p342 = por %p340, %p341
      %s344 = sadd.s32 %s343, 1
      %p347 = scmp.eq.s32.totalorder %s26, 1
      %p348 = scmp.ne.s32.totalorder %s343, %s345
      %p349 = scmp.eq.s32.totalorder %s26, 0
      %p350 = por %p348, %p349
      %p351 = scmp.ne.s32.totalorder %s343, %s345
      %p352 = scmp.eq.s32.totalorder %s31, 1
      %p353 = por %p351, %p352
      %p354 = scmp.ne.s32.totalorder %s345, %s346
      %p355 = scmp.eq.s32.totalorder %s31, 0
      %p356 = por %p354, %p355
      %p357 = scmp.ne.s32.totalorder %s345, %s346
      %p358 = scmp.eq.s32.totalorder %s32, 1
      %p359 = por %p357, %p358
      %p361 = scmp.ne.s32.totalorder %s346, %s360
      %p362 = scmp.eq.s32.totalorder %s32, 0
      %p363 = por %p361, %p362
      %s364 = ssub.s32 %s26, %s33
      %p365 = scmp.eq.s32.totalorder %s364, 0
      %s367 = sadd.s32 %s366, 1
      %s368 = scalar_select %p365, %s366, %s367
      %p371 = pneg %p365
      %p372 = scmp.eq.s32.totalorder %s26, 1
      %p373 = por %p371, %p372
      %p374 = scmp.ne.s32.totalorder %s366, %s369
      %p375 = scmp.eq.s32.totalorder %s26, 0
      %p376 = por %p374, %p375
      %p377 = scmp.ne.s32.totalorder %s366, %s369
      %p378 = scmp.eq.s32.totalorder %s31, 1
      %p379 = por %p377, %p378
      %p380 = scmp.ne.s32.totalorder %s369, %s370
      %p381 = scmp.eq.s32.totalorder %s31, 0
      %p382 = por %p380, %p381
      %p383 = scmp.ne.s32.totalorder %s369, %s370
      %p384 = scmp.eq.s32.totalorder %s32, 1
      %p385 = por %p383, %p384
      %p387 = scmp.ne.s32.totalorder %s370, %s386
      %p388 = scmp.eq.s32.totalorder %s32, 0
      %p389 = por %p387, %p388
      %p390 = scmp.le.s32.totalorder 1, %s26
      %p391 = scmp.lt.s32.totalorder %s26, 3
      %p392 = pnand %p390, %p391
      %p393 = pneg %p392
      // Predicated region
      $region9: #{tpu_custom_call.1} parent=5 // pred_check
        _
      $region10: #{tpu_custom_call.1} parent=5 // pred_check_branch
        %395 = sbr.rel (%p392) target = $region12
      $region11: #{tpu_custom_call.1} parent=5 // pred_region
        %s396 = ssub.s32 %s26, 1
        // Predicated region
        $region13: #{tpu_custom_call.1} parent=11 // pred_check
          %p397 = pneg %p125
        $region14: #{tpu_custom_call.1} parent=11 // pred_check_branch
          %399 = sbr.rel (%p397) target = $region16
        $region15: #{tpu_custom_call.1} parent=11 // pred_region
          _
        $region16: #{tpu_custom_call.1} parent=11 // pred_fallthru
          _
        // Predicated region
        $region17: #{tpu_custom_call.1} parent=11 // pred_check
          %p400 = pneg %p146
        $region18: #{tpu_custom_call.1} parent=11 // pred_check_branch
          %402 = sbr.rel (%p400) target = $region20
        $region19: #{tpu_custom_call.1} parent=11 // pred_region
          _
        $region20: #{tpu_custom_call.1} parent=11 // pred_fallthru
          _
        // Predicated region
        $region21: #{tpu_custom_call.1} parent=11 // pred_check
          %p403 = pneg %p167
        $region22: #{tpu_custom_call.1} parent=11 // pred_check_branch
          %405 = sbr.rel (%p403) target = $region24
        $region23: #{tpu_custom_call.1} parent=11 // pred_region
          %407 = vsyncadd [#allocation4], 0
          %s408 = sshll.u32 %s5, 4
          %s409 = int_to_ptr.hbm [resolvable:$true] %s408
          %s410 = sshll.u32 [#allocation3], 4
          %s411 = int_to_ptr.vmem [resolvable:$true] %s410
          %416 = dma.hbm_to_vmem [thread:$0]  %s409, 512, %s411, [#allocation4], 64, 64, 4
        $region24: #{tpu_custom_call.1} parent=11 // pred_fallthru
          _
        // Predicated region
        $region25: #{tpu_custom_call.1} parent=11 // pred_check
          %p417 = pneg %p188
        $region26: #{tpu_custom_call.1} parent=11 // pred_check_branch
          %419 = sbr.rel (%p417) target = $region28
        $region27: #{tpu_custom_call.1} parent=11 // pred_region
          _
        $region28: #{tpu_custom_call.1} parent=11 // pred_fallthru
          _
        // Predicated region
        $region29: #{tpu_custom_call.1} parent=11 // pred_check
          %p420 = pneg %p209
        $region30: #{tpu_custom_call.1} parent=11 // pred_check_branch
          %422 = sbr.rel (%p420) target = $region32
        $region31: #{tpu_custom_call.1} parent=11 // pred_region
          _
        $region32: #{tpu_custom_call.1} parent=11 // pred_fallthru
          _
        // Predicated region
        $region33: #{tpu_custom_call.1} parent=11 // pred_check
          %p423 = pneg %p230
        $region34: #{tpu_custom_call.1} parent=11 // pred_check_branch
          %425 = sbr.rel (%p423) target = $region36
        $region35: #{tpu_custom_call.1} parent=11 // pred_region
          _
        $region36: #{tpu_custom_call.1} parent=11 // pred_fallthru
          _
        // Predicated region
        $region37: #{tpu_custom_call.1} parent=11 // pred_check
          %p426 = pneg %p251
        $region38: #{tpu_custom_call.1} parent=11 // pred_check_branch
          %428 = sbr.rel (%p426) target = $region40
        $region39: #{tpu_custom_call.1} parent=11 // pred_region
          %430 = vsyncadd [#allocation7], 0
          %s431 = sshll.u32 %s9, 4
          %s432 = int_to_ptr.hbm [resolvable:$true] %s431
          %s433 = sshll.u32 [#allocation6], 4
          %s434 = int_to_ptr.vmem [resolvable:$true] %s433
          %439 = dma.hbm_to_vmem [thread:$0]  %s432, 512, %s434, [#allocation7], 64, 64, 4
        $region40: #{tpu_custom_call.1} parent=11 // pred_fallthru
          _
        // Predicated region
        $region41: #{tpu_custom_call.1} parent=11 // pred_check
          %p440 = pneg %p272
        $region42: #{tpu_custom_call.1} parent=11 // pred_check_branch
          %442 = sbr.rel (%p440) target = $region44
        $region43: #{tpu_custom_call.1} parent=11 // pred_region
          _
        $region44: #{tpu_custom_call.1} parent=11 // pred_fallthru
          _
        // Predicated region
        $region45: #{tpu_custom_call.1} parent=11 // pred_check
          %p443 = pneg %p293
        $region46: #{tpu_custom_call.1} parent=11 // pred_check_branch
          %445 = sbr.rel (%p443) target = $region48
        $region47: #{tpu_custom_call.1} parent=11 // pred_region
          _
        $region48: #{tpu_custom_call.1} parent=11 // pred_fallthru
          _
        // Predicated region
        $region49: #{tpu_custom_call.1} parent=11 // pred_check
          %p446 = pneg %p314
        $region50: #{tpu_custom_call.1} parent=11 // pred_check_branch
          %448 = sbr.rel (%p446) target = $region52
        $region51: #{tpu_custom_call.1} parent=11 // pred_region
          _
        $region52: #{tpu_custom_call.1} parent=11 // pred_fallthru
          _
        // Predicated region
        $region53: #{tpu_custom_call.1} parent=11 // pred_check
          %p449 = pneg %p335
        $region54: #{tpu_custom_call.1} parent=11 // pred_check_branch
          %451 = sbr.rel (%p449) target = $region56
        $region55: #{tpu_custom_call.1} parent=11 // pred_region
          _
        $region56: #{tpu_custom_call.1} parent=11 // pred_fallthru
          _
        // Predicated region
        $region57: #{tpu_custom_call.1} parent=11 // pred_check
          %p452 = pneg %p356
        $region58: #{tpu_custom_call.1} parent=11 // pred_check_branch
          %454 = sbr.rel (%p452) target = $region60
        $region59: #{tpu_custom_call.1} parent=11 // pred_region
          _
        $region60: #{tpu_custom_call.1} parent=11 // pred_fallthru
          _
      $region12: #{tpu_custom_call.1} parent=5 // pred_fallthru
        _
      %p455 = scmp.lt.s32.totalorder %s26, 2
      // Predicated region
      $region61: #{tpu_custom_call.1} parent=5 // pred_check
        %p456 = pneg %p455
      $region62: #{tpu_custom_call.1} parent=5 // pred_check_branch
        %458 = sbr.rel (%p456) target = $region64
      $region63: #{tpu_custom_call.1} parent=5 // pred_region
        // Predicated region
        $region65: #{tpu_custom_call.1} parent=63 // pred_check
          %p459 = pneg %p46
        $region66: #{tpu_custom_call.1} parent=63 // pred_check_branch
          %461 = sbr.rel (%p459) target = $region68
        $region67: #{tpu_custom_call.1} parent=63 // pred_region
          %p462 = scmp.lt.s32.totalorder %s26, 1
          %s463 = scalar_select %p462, %s26, 1
          %s464 = smul.addr %s463, 2
          %s465 = smul.addr %s464, 8
          %s466 = scalar_lea.vmem %s0, %s465
        $region68: #{tpu_custom_call.1} parent=63 // pred_fallthru
          _
        // Predicated region
        $region69: #{tpu_custom_call.1} parent=63 // pred_check
          %p467 = pneg %p72
        $region70: #{tpu_custom_call.1} parent=63 // pred_check_branch
          %469 = sbr.rel (%p467) target = $region72
        $region71: #{tpu_custom_call.1} parent=63 // pred_region
          %p470 = scmp.lt.s32.totalorder %s26, 1
          %s471 = scalar_select %p470, %s26, 1
          %s472 = scalar_lea.vmem %s1, %s471
        $region72: #{tpu_custom_call.1} parent=63 // pred_fallthru
          _
        // Predicated region
        $region73: #{tpu_custom_call.1} parent=63 // pred_check
          %p473 = pneg %p98
        $region74: #{tpu_custom_call.1} parent=63 // pred_check_branch
          %475 = sbr.rel (%p473) target = $region76
        $region75: #{tpu_custom_call.1} parent=63 // pred_region
          %p476 = scmp.lt.s32.totalorder %s26, 1
          %s477 = scalar_select %p476, %s26, 1
          %s478 = smul.addr %s477, 2
          %s479 = smul.addr %s478, 8
          %s480 = scalar_lea.vmem %s2, %s479
        $region76: #{tpu_custom_call.1} parent=63 // pred_fallthru
          _
      $region64: #{tpu_custom_call.1} parent=5 // pred_fallthru
        _
      %p481 = scmp.le.s32.totalorder 1, %s26
      %p482 = scmp.lt.s32.totalorder %s26, 3
      %p483 = pnand %p481, %p482
      %p484 = pneg %p483
      // Predicated region
      $region77: #{tpu_custom_call.1} parent=5 // pred_check
        _
      $region78: #{tpu_custom_call.1} parent=5 // pred_check_branch
        %486 = sbr.rel (%p483) target = $region80
      $region79: #{tpu_custom_call.1} parent=5 // pred_region
        %s487 = ssub.s32 %s26, 1
        // Predicated region
        $region81: #{tpu_custom_call.1} parent=79 // pred_check
          %p488 = pneg %p167
        $region82: #{tpu_custom_call.1} parent=79 // pred_check_branch
          %490 = sbr.rel (%p488) target = $region84
        $region83: #{tpu_custom_call.1} parent=79 // pred_region
          %492 = dma.done [#allocation4], 512
        $region84: #{tpu_custom_call.1} parent=79 // pred_fallthru
          _
        // Predicated region
        $region85: #{tpu_custom_call.1} parent=79 // pred_check
          %p493 = pneg %p251
        $region86: #{tpu_custom_call.1} parent=79 // pred_check_branch
          %495 = sbr.rel (%p493) target = $region88
        $region87: #{tpu_custom_call.1} parent=79 // pred_region
          %497 = dma.done [#allocation7], 512
        $region88: #{tpu_custom_call.1} parent=79 // pred_fallthru
          _
        %p498 = scmp.lt.s32.totalorder %s31, 1
        %s499 = scalar_select %p498, %s31, 1
        %s500 = smul.addr %s499, 2
        %s501 = smul.addr %s500, 8
        %s502 = scalar_lea.vmem %s0, %s501
        %p503 = pneg %p52
        %p504 = pneg %p49
        %p505 = scmp.lt.s32.totalorder %s31, 1
        %s506 = scalar_select %p505, %s31, 1
        %s507 = scalar_lea.vmem %s1, %s506
        %p508 = pneg %p78
        %p509 = pneg %p75
        %p510 = scmp.lt.s32.totalorder %s31, 1
        %s511 = scalar_select %p510, %s31, 1
        %s512 = smul.addr %s511, 2
        %s513 = smul.addr %s512, 8
        %s514 = scalar_lea.vmem %s2, %s513
        %p515 = pneg %p104
        %p516 = pneg %p101
        %p517 = pneg %p125
        %p518 = pneg %p122
        %p519 = pneg %p146
        %p520 = pneg %p143
        %p521 = pneg %p167
        %p522 = pneg %p164
        %p523 = pneg %p188
        %p524 = pneg %p185
        %p525 = pneg %p209
        %p526 = pneg %p206
        %p527 = pneg %p230
        %p528 = pneg %p227
        %p529 = pneg %p251
        %p530 = pneg %p248
        %p531 = pneg %p272
        %p532 = pneg %p269
        %p533 = pneg %p293
        %p534 = pneg %p290
        %p535 = pneg %p314
        %p536 = pneg %p311
        %p537 = pneg %p335
        %p538 = pneg %p332
        %p539 = pneg %p356
        %p540 = pneg %p353
        %p541 = pneg %p382
        %p542 = pneg %p379
        %s543 = sand.u32 %s369, 1
        %s544 = scalar_lea.sflag [#allocation5], %s543
        %s545 = sand.u32 %s369, 1
        %s546 = smul.addr %s545, 16
        %s547 = scalar_lea.vmem [#allocation8], %s546
        %p548 = scmp.lt.s32.totalorder %s31, 1
        %s549 = scalar_select %p548, %s31, 1
        %s550 = smul.addr %s549, 2
        %s551 = smul.addr %s550, 8
        %s552 = scalar_lea.vmem %s0, %s551
        %p553 = scmp.lt.s32.totalorder %s31, 1
        %s554 = scalar_select %p553, %s31, 1
        %s555 = scalar_lea.vmem %s1, %s554
        %p556 = scmp.lt.s32.totalorder %s31, 1
        %s557 = scalar_select %p556, %s31, 1
        %s558 = smul.addr %s557, 2
        %s559 = smul.addr %s558, 8
        %s560 = scalar_lea.vmem %s2, %s559
        %v562 = vld [vmem:[%s552] sm:$0xff]
        %v563 = vld [vmem:[%s552 + $0x8] sm:$0xff]
        %v564 = vpack.c.bf16 %v563, %v562
        %v565 = vld [vmem:[%s555] sm:$0x1]
        %v566 = vld [vmem:[%s3] sm:$0xff]
        %v567 = vld [vmem:[%s3 + $0x8] sm:$0xff]
        %v568 = vld [vmem:[%s3 + $0x10] sm:$0xff]
        %v569 = vld [vmem:[%s3 + $0x18] sm:$0xff]
        %v570 = vld [vmem:[%s3 + $0x20] sm:$0xff]
        %v571 = vld [vmem:[%s3 + $0x28] sm:$0xff]
        %v572 = vld [vmem:[%s3 + $0x30] sm:$0xff]
        %v573 = vld [vmem:[%s3 + $0x38] sm:$0xff]
        %v574 = vld [vmem:[%s4] sm:$0x3]
        %v576 = vperm.slane %v574, 0
        %v577 = vperm.slane %v574, 1
        %v588 = vunpack.c.l.b16 %v566
        %v589 = vunpack.c.h.b16 %v566
        %v590 = vunpack.c.l.b16 %v567
        %v591 = vunpack.c.h.b16 %v567
        %v592 = vunpack.c.l.b16 %v568
        %v593 = vunpack.c.h.b16 %v568
        %v594 = vunpack.c.l.b16 %v569
        %v595 = vunpack.c.h.b16 %v569
        %v596 = vunpack.c.l.b16 %v570
        %v597 = vunpack.c.h.b16 %v570
        %v598 = vunpack.c.l.b16 %v571
        %v599 = vunpack.c.h.b16 %v571
        %v600 = vunpack.c.l.b16 %v572
        %v601 = vunpack.c.h.b16 %v572
        %v602 = vunpack.c.l.b16 %v573
        %v603 = vunpack.c.h.b16 %v573
        %v604 = vpack.c.b16 %v590, %v588
        %v605 = vpack.c.b16 %v591, %v589
        %v606 = vpack.c.b16 %v594, %v592
        %v607 = vpack.c.b16 %v595, %v593
        %v608 = vpack.c.b16 %v598, %v596
        %v609 = vpack.c.b16 %v599, %v597
        %v610 = vpack.c.b16 %v602, %v600
        %v611 = vpack.c.b16 %v603, %v601
        %vm620 = vcmask 523264
        %v622 = vsel %vm620, %v564, 0
        %624 = vmatpush.bf16.msra.mxu0 0
        %625 = vmatpush.bf16.msra.mxu0 0
        %626 = vmatpush.bf16.msra.mxu0 0
        %627 = vmatpush.bf16.msra.mxu0 0
        %628 = vmatpush.bf16.msra.mxu0 %v610
        %629 = vmatpush.bf16.msra.mxu0 %v608
        %630 = vmatpush.bf16.msra.mxu0 %v606
        %631 = vmatpush.bf16.msra.mxu0 %v604
        %632 = vmatmul.bf16.gmra.mxu0 %v622
        %v633 = vpop.f32.mrf.mxu0
        %v634 = vadd.f32 %v576, %v633
        %v635 = vpop.f32.mrf.mxu0
        %v636 = vadd.f32 %v576, %v635
        %637 = vdwg.mxu0
        %638 = vmatpush.bf16.msra.mxu0 0
        %639 = vmatpush.bf16.msra.mxu0 0
        %640 = vmatpush.bf16.msra.mxu0 0
        %641 = vmatpush.bf16.msra.mxu0 0
        %642 = vmatpush.bf16.msra.mxu0 %v611
        %643 = vmatpush.bf16.msra.mxu0 %v609
        %644 = vmatpush.bf16.msra.mxu0 %v607
        %645 = vmatpush.bf16.msra.mxu0 %v605
        %646 = vmatmul.bf16.gmra.mxu0 %v622
        %v647 = vpop.f32.mrf.mxu0
        %v648 = vadd.f32 %v577, %v647
        %v649 = vpop.f32.mrf.mxu0
        %v650 = vadd.f32 %v577, %v649
        %651 = vdwg.mxu0
        %v652 = vmul.f32 %v634, 0.25
        %v653 = vmul.f32 %v636, 0.25
        %v654 = vpack.c.bf16 %v652, %v652
        %v655 = vpack.c.bf16 %v653, %v653
        %vm656 = vcmask 519168
        %657 = vst.msk [vmem:[#allocation2] sm:$0xf] %vm656, %v654
        %658 = vst.msk [vmem:[#allocation2 + $0x4] sm:$0xf] %vm656, %v655
        %661 = vrot.lane.b32.xlu0 %v634, 112
        %v662 = vpop.permute.xlu0 %661
        %663 = vrot.lane.b32.xlu0 %v636, 112
        %v664 = vpop.permute.xlu0 %663
        %665 = vrot.lane.b32.xlu0 %v634, 96
        %v666 = vpop.permute.xlu0 %665
        %667 = vrot.lane.b32.xlu0 %v636, 96
        %v668 = vpop.permute.xlu0 %667
        %669 = vrot.lane.b32.xlu0 %v634, 80
        %v670 = vpop.permute.xlu0 %669
        %671 = vrot.lane.b32.xlu0 %v636, 80
        %v672 = vpop.permute.xlu0 %671
        %673 = vrot.lane.b32.xlu0 %v634, 64
        %v674 = vpop.permute.xlu0 %673
        %675 = vrot.lane.b32.xlu0 %v636, 64
        %v676 = vpop.permute.xlu0 %675
        %677 = vrot.lane.b32.xlu0 %v662, 64
        %v678 = vpop.permute.xlu0 %677
        %679 = vrot.lane.b32.xlu0 %v664, 64
        %v680 = vpop.permute.xlu0 %679
        %681 = vrot.lane.b32.xlu0 %v666, 64
        %v682 = vpop.permute.xlu0 %681
        %683 = vrot.lane.b32.xlu0 %v668, 64
        %v684 = vpop.permute.xlu0 %683
        %685 = vrot.lane.b32.xlu0 %v670, 64
        %v686 = vpop.permute.xlu0 %685
        %687 = vrot.lane.b32.xlu0 %v672, 64
        %v688 = vpop.permute.xlu0 %687
        %v697 = vrot.slane %v682, 4
        %vm698 = vcmask 1047556
        %v699 = vsel %vm698, %v697, %v674
        %v700 = vrot.slane %v674, 4
        %v701 = vsel %vm698, %v682, %v700
        %v703 = vunpack.c.l.s4 1983009808
        %v704 = vunpack.c.0.s8 %v703
        %v705 = vperm.slane %v699, %v704
        %v707 = vunpack.c.l.s4 1983009808
        %v708 = vunpack.c.0.s8 %v707
        %v709 = vperm.slane %v701, %v708
        %v710 = vrot.slane %v686, 4
        %v711 = vsel %vm698, %v710, %v678
        %v712 = vrot.slane %v678, 4
        %v713 = vsel %vm698, %v686, %v712
        %v715 = vunpack.c.l.s4 1983009808
        %v716 = vunpack.c.0.s8 %v715
        %v717 = vperm.slane %v711, %v716
        %v719 = vunpack.c.l.s4 1983009808
        %v720 = vunpack.c.0.s8 %v719
        %v721 = vperm.slane %v713, %v720
        %v722 = vrot.slane %v717, 4
        %v723 = vsel %vm698, %v722, %v705
        %v724 = vrot.slane %v705, 4
        %v725 = vsel %vm698, %v717, %v724
        %v727 = vunpack.c.l.s4 1934713408
        %v728 = vunpack.c.0.s8 %v727
        %v729 = vperm.slane %v723, %v728
        %v731 = vunpack.c.l.s4 1934713408
        %v732 = vunpack.c.0.s8 %v731
        %v733 = vperm.slane %v725, %v732
        %v734 = vrot.slane %v721, 4
        %v735 = vsel %vm698, %v734, %v709
        %v736 = vrot.slane %v709, 4
        %v737 = vsel %vm698, %v721, %v736
        %v739 = vunpack.c.l.s4 1934713408
        %v740 = vunpack.c.0.s8 %v739
        %v741 = vperm.slane %v735, %v740
        %v743 = vunpack.c.l.s4 1934713408
        %v744 = vunpack.c.0.s8 %v743
        %v745 = vperm.slane %v737, %v744
        %v746 = vrot.slane %v729, 4
        %v747 = vsel %vm698, 0.0, %v746
        %v748 = vrot.slane %v733, 4
        %v749 = vsel %vm698, 0.0, %v748
        %v750 = vrot.slane %v741, 4
        %v751 = vsel %vm698, 0.0, %v750
        %v752 = vrot.slane %v745, 4
        %v753 = vsel %vm698, 0.0, %v752
        %v754 = vrot.slane %v684, 4
        %v755 = vsel %vm698, %v754, %v676
        %v756 = vrot.slane %v676, 4
        %v757 = vsel %vm698, %v684, %v756
        %v759 = vunpack.c.l.s4 1983009808
        %v760 = vunpack.c.0.s8 %v759
        %v761 = vperm.slane %v755, %v760
        %v763 = vunpack.c.l.s4 1983009808
        %v764 = vunpack.c.0.s8 %v763
        %v765 = vperm.slane %v757, %v764
        %v766 = vrot.slane %v688, 4
        %v767 = vsel %vm698, %v766, %v680
        %v768 = vrot.slane %v680, 4
        %v769 = vsel %vm698, %v688, %v768
        %v771 = vunpack.c.l.s4 1983009808
        %v772 = vunpack.c.0.s8 %v771
        %v773 = vperm.slane %v767, %v772
        %v775 = vunpack.c.l.s4 1983009808
        %v776 = vunpack.c.0.s8 %v775
        %v777 = vperm.slane %v769, %v776
        %v778 = vrot.slane %v773, 4
        %v779 = vsel %vm698, %v778, %v761
        %v780 = vrot.slane %v761, 4
        %v781 = vsel %vm698, %v773, %v780
        %v783 = vunpack.c.l.s4 1934713408
        %v784 = vunpack.c.0.s8 %v783
        %v785 = vperm.slane %v779, %v784
        %v787 = vunpack.c.l.s4 1934713408
        %v788 = vunpack.c.0.s8 %v787
        %v789 = vperm.slane %v781, %v788
        %v790 = vrot.slane %v777, 4
        %v791 = vsel %vm698, %v790, %v765
        %v792 = vrot.slane %v765, 4
        %v793 = vsel %vm698, %v777, %v792
        %v795 = vunpack.c.l.s4 1934713408
        %v796 = vunpack.c.0.s8 %v795
        %v797 = vperm.slane %v791, %v796
        %v799 = vunpack.c.l.s4 1934713408
        %v800 = vunpack.c.0.s8 %v799
        %v801 = vperm.slane %v793, %v800
        %v802 = vrot.slane %v785, 4
        %v803 = vsel %vm698, 0.0, %v802
        %v804 = vrot.slane %v789, 4
        %v805 = vsel %vm698, 0.0, %v804
        %v806 = vrot.slane %v797, 4
        %v807 = vsel %vm698, 0.0, %v806
        %v808 = vrot.slane %v801, 4
        %v809 = vsel %vm698, 0.0, %v808
        %v810 = vsel %vm698, %v748, %v729
        %v812 = vunpack.c.l.s4 1983009808
        %v813 = vunpack.c.0.s8 %v812
        %v814 = vperm.slane %v810, %v813
        %v815 = vrot.slane %v749, 4
        %v816 = vsel %vm698, %v815, %v747
        %v818 = vunpack.c.l.s4 1983009808
        %v819 = vunpack.c.0.s8 %v818
        %v820 = vperm.slane %v816, %v819
        %v821 = vsel %vm698, %v752, %v741
        %v823 = vunpack.c.l.s4 1983009808
        %v824 = vunpack.c.0.s8 %v823
        %v825 = vperm.slane %v821, %v824
        %v826 = vrot.slane %v753, 4
        %v827 = vsel %vm698, %v826, %v751
        %v829 = vunpack.c.l.s4 1983009808
        %v830 = vunpack.c.0.s8 %v829
        %v831 = vperm.slane %v827, %v830
        %v832 = vrot.slane %v820, 4
        %v833 = vsel %vm698, %v832, %v814
        %v834 = vrot.slane %v814, 4
        %v835 = vsel %vm698, %v820, %v834
        %v837 = vunpack.c.l.s4 1934713408
        %v838 = vunpack.c.0.s8 %v837
        %v839 = vperm.slane %v833, %v838
        %v841 = vunpack.c.l.s4 1934713408
        %v842 = vunpack.c.0.s8 %v841
        %v843 = vperm.slane %v835, %v842
        %v844 = vrot.slane %v831, 4
        %v845 = vsel %vm698, %v844, %v825
        %v846 = vrot.slane %v825, 4
        %v847 = vsel %vm698, %v831, %v846
        %v849 = vunpack.c.l.s4 1934713408
        %v850 = vunpack.c.0.s8 %v849
        %v851 = vperm.slane %v845, %v850
        %v853 = vunpack.c.l.s4 1934713408
        %v854 = vunpack.c.0.s8 %v853
        %v855 = vperm.slane %v847, %v854
        %v856 = vrot.slane %v851, 4
        %v857 = vsel %vm698, %v856, %v839
        %v858 = vrot.slane %v839, 4
        %v859 = vsel %vm698, %v851, %v858
        %v860 = vrot.slane %v855, 4
        %v861 = vsel %vm698, %v860, %v843
        %v862 = vrot.slane %v843, 4
        %v863 = vsel %vm698, %v855, %v862
        %v864 = vsel %vm698, %v804, %v785
        %v866 = vunpack.c.l.s4 1983009808
        %v867 = vunpack.c.0.s8 %v866
        %v868 = vperm.slane %v864, %v867
        %v869 = vrot.slane %v805, 4
        %v870 = vsel %vm698, %v869, %v803
        %v872 = vunpack.c.l.s4 1983009808
        %v873 = vunpack.c.0.s8 %v872
        %v874 = vperm.slane %v870, %v873
        %v875 = vsel %vm698, %v808, %v797
        %v877 = vunpack.c.l.s4 1983009808
        %v878 = vunpack.c.0.s8 %v877
        %v879 = vperm.slane %v875, %v878
        %v880 = vrot.slane %v809, 4
        %v881 = vsel %vm698, %v880, %v807
        %v883 = vunpack.c.l.s4 1983009808
        %v884 = vunpack.c.0.s8 %v883
        %v885 = vperm.slane %v881, %v884
        %v886 = vrot.slane %v874, 4
        %v887 = vsel %vm698, %v886, %v868
        %v888 = vrot.slane %v868, 4
        %v889 = vsel %vm698, %v874, %v888
        %v891 = vunpack.c.l.s4 1934713408
        %v892 = vunpack.c.0.s8 %v891
        %v893 = vperm.slane %v887, %v892
        %v895 = vunpack.c.l.s4 1934713408
        %v896 = vunpack.c.0.s8 %v895
        %v897 = vperm.slane %v889, %v896
        %v898 = vrot.slane %v885, 4
        %v899 = vsel %vm698, %v898, %v879
        %v900 = vrot.slane %v879, 4
        %v901 = vsel %vm698, %v885, %v900
        %v903 = vunpack.c.l.s4 1934713408
        %v904 = vunpack.c.0.s8 %v903
        %v905 = vperm.slane %v899, %v904
        %v907 = vunpack.c.l.s4 1934713408
        %v908 = vunpack.c.0.s8 %v907
        %v909 = vperm.slane %v901, %v908
        %v910 = vrot.slane %v905, 4
        %v911 = vsel %vm698, %v910, %v893
        %v912 = vrot.slane %v893, 4
        %v913 = vsel %vm698, %v905, %v912
        %v914 = vrot.slane %v909, 4
        %v915 = vsel %vm698, %v914, %v897
        %v916 = vrot.slane %v897, 4
        %v917 = vsel %vm698, %v909, %v916
        %v918 = vpack.c.bf16 %v857, %v857
        %v919 = vpack.c.bf16 %v911, %v911
        %v920 = vpack.c.bf16 %v859, %v859
        %v921 = vpack.c.bf16 %v913, %v913
        %v922 = vpack.c.bf16 %v861, %v861
        %v923 = vpack.c.bf16 %v915, %v915
        %v924 = vpack.c.bf16 %v863, %v863
        %v925 = vpack.c.bf16 %v917, %v917
        %928 = vrot.lane.b32.xlu0 %v648, 112
        %v929 = vpop.permute.xlu0 %928
        %930 = vrot.lane.b32.xlu0 %v650, 112
        %v931 = vpop.permute.xlu0 %930
        %934 = vrot.lane.b32.xlu0 %v648, 96
        %v935 = vpop.permute.xlu0 %934
        %936 = vrot.lane.b32.xlu0 %v650, 96
        %v937 = vpop.permute.xlu0 %936
        %940 = vrot.lane.b32.xlu0 %v648, 80
        %v941 = vpop.permute.xlu0 %940
        %942 = vrot.lane.b32.xlu0 %v650, 80
        %v943 = vpop.permute.xlu0 %942
        %v946 = vrot.slane %v935, 4
        %v947 = vsel %vm698, %v946, %v648
        %v948 = vrot.slane %v648, 4
        %v949 = vsel %vm698, %v935, %v948
        %v951 = vunpack.c.l.s4 1983009808
        %v952 = vunpack.c.0.s8 %v951
        %v953 = vperm.slane %v947, %v952
        %v955 = vunpack.c.l.s4 1983009808
        %v956 = vunpack.c.0.s8 %v955
        %v957 = vperm.slane %v949, %v956
        %v958 = vrot.slane %v941, 4
        %v959 = vsel %vm698, %v958, %v929
        %v960 = vrot.slane %v929, 4
        %v961 = vsel %vm698, %v941, %v960
        %v963 = vunpack.c.l.s4 1983009808
        %v964 = vunpack.c.0.s8 %v963
        %v965 = vperm.slane %v959, %v964
        %v967 = vunpack.c.l.s4 1983009808
        %v968 = vunpack.c.0.s8 %v967
        %v969 = vperm.slane %v961, %v968
        %v970 = vrot.slane %v965, 4
        %v971 = vsel %vm698, %v970, %v953
        %v972 = vrot.slane %v953, 4
        %v973 = vsel %vm698, %v965, %v972
        %v975 = vunpack.c.l.s4 1934713408
        %v976 = vunpack.c.0.s8 %v975
        %v977 = vperm.slane %v971, %v976
        %v979 = vunpack.c.l.s4 1934713408
        %v980 = vunpack.c.0.s8 %v979
        %v981 = vperm.slane %v973, %v980
        %v982 = vrot.slane %v969, 4
        %v983 = vsel %vm698, %v982, %v957
        %v984 = vrot.slane %v957, 4
        %v985 = vsel %vm698, %v969, %v984
        %v987 = vunpack.c.l.s4 1934713408
        %v988 = vunpack.c.0.s8 %v987
        %v989 = vperm.slane %v983, %v988
        %v991 = vunpack.c.l.s4 1934713408
        %v992 = vunpack.c.0.s8 %v991
        %v993 = vperm.slane %v985, %v992
        %v994 = vrot.slane %v977, 4
        %v995 = vsel %vm698, 0.0, %v994
        %v996 = vrot.slane %v981, 4
        %v997 = vsel %vm698, 0.0, %v996
        %v998 = vrot.slane %v989, 4
        %v999 = vsel %vm698, 0.0, %v998
        %v1000 = vrot.slane %v993, 4
        %v1001 = vsel %vm698, 0.0, %v1000
        %v1002 = vrot.slane %v937, 4
        %v1003 = vsel %vm698, %v1002, %v650
        %v1004 = vrot.slane %v650, 4
        %v1005 = vsel %vm698, %v937, %v1004
        %v1007 = vunpack.c.l.s4 1983009808
        %v1008 = vunpack.c.0.s8 %v1007
        %v1009 = vperm.slane %v1003, %v1008
        %v1011 = vunpack.c.l.s4 1983009808
        %v1012 = vunpack.c.0.s8 %v1011
        %v1013 = vperm.slane %v1005, %v1012
        %v1014 = vrot.slane %v943, 4
        %v1015 = vsel %vm698, %v1014, %v931
        %v1016 = vrot.slane %v931, 4
        %v1017 = vsel %vm698, %v943, %v1016
        %v1019 = vunpack.c.l.s4 1983009808
        %v1020 = vunpack.c.0.s8 %v1019
        %v1021 = vperm.slane %v1015, %v1020
        %v1023 = vunpack.c.l.s4 1983009808
        %v1024 = vunpack.c.0.s8 %v1023
        %v1025 = vperm.slane %v1017, %v1024
        %v1026 = vrot.slane %v1021, 4
        %v1027 = vsel %vm698, %v1026, %v1009
        %v1028 = vrot.slane %v1009, 4
        %v1029 = vsel %vm698, %v1021, %v1028
        %v1031 = vunpack.c.l.s4 1934713408
        %v1032 = vunpack.c.0.s8 %v1031
        %v1033 = vperm.slane %v1027, %v1032
        %v1035 = vunpack.c.l.s4 1934713408
        %v1036 = vunpack.c.0.s8 %v1035
        %v1037 = vperm.slane %v1029, %v1036
        %v1038 = vrot.slane %v1025, 4
        %v1039 = vsel %vm698, %v1038, %v1013
        %v1040 = vrot.slane %v1013, 4
        %v1041 = vsel %vm698, %v1025, %v1040
        %v1043 = vunpack.c.l.s4 1934713408
        %v1044 = vunpack.c.0.s8 %v1043
        %v1045 = vperm.slane %v1039, %v1044
        %v1047 = vunpack.c.l.s4 1934713408
        %v1048 = vunpack.c.0.s8 %v1047
        %v1049 = vperm.slane %v1041, %v1048
        %v1050 = vrot.slane %v1033, 4
        %v1051 = vsel %vm698, 0.0, %v1050
        %v1052 = vrot.slane %v1037, 4
        %v1053 = vsel %vm698, 0.0, %v1052
        %v1054 = vrot.slane %v1045, 4
        %v1055 = vsel %vm698, 0.0, %v1054
        %v1056 = vrot.slane %v1049, 4
        %v1057 = vsel %vm698, 0.0, %v1056
        %v1058 = vsel %vm698, %v996, %v977
        %v1060 = vunpack.c.l.s4 1983009808
        %v1061 = vunpack.c.0.s8 %v1060
        %v1062 = vperm.slane %v1058, %v1061
        %v1063 = vrot.slane %v997, 4
        %v1064 = vsel %vm698, %v1063, %v995
        %v1066 = vunpack.c.l.s4 1983009808
        %v1067 = vunpack.c.0.s8 %v1066
        %v1068 = vperm.slane %v1064, %v1067
        %v1069 = vsel %vm698, %v1000, %v989
        %v1071 = vunpack.c.l.s4 1983009808
        %v1072 = vunpack.c.0.s8 %v1071
        %v1073 = vperm.slane %v1069, %v1072
        %v1074 = vrot.slane %v1001, 4
        %v1075 = vsel %vm698, %v1074, %v999
        %v1077 = vunpack.c.l.s4 1983009808
        %v1078 = vunpack.c.0.s8 %v1077
        %v1079 = vperm.slane %v1075, %v1078
        %v1080 = vrot.slane %v1068, 4
        %v1081 = vsel %vm698, %v1080, %v1062
        %v1082 = vrot.slane %v1062, 4
        %v1083 = vsel %vm698, %v1068, %v1082
        %v1085 = vunpack.c.l.s4 1934713408
        %v1086 = vunpack.c.0.s8 %v1085
        %v1087 = vperm.slane %v1081, %v1086
        %v1089 = vunpack.c.l.s4 1934713408
        %v1090 = vunpack.c.0.s8 %v1089
        %v1091 = vperm.slane %v1083, %v1090
        %v1092 = vrot.slane %v1079, 4
        %v1093 = vsel %vm698, %v1092, %v1073
        %v1094 = vrot.slane %v1073, 4
        %v1095 = vsel %vm698, %v1079, %v1094
        %v1097 = vunpack.c.l.s4 1934713408
        %v1098 = vunpack.c.0.s8 %v1097
        %v1099 = vperm.slane %v1093, %v1098
        %v1101 = vunpack.c.l.s4 1934713408
        %v1102 = vunpack.c.0.s8 %v1101
        %v1103 = vperm.slane %v1095, %v1102
        %v1104 = vrot.slane %v1099, 4
        %v1105 = vsel %vm698, %v1104, %v1087
        %v1106 = vrot.slane %v1087, 4
        %v1107 = vsel %vm698, %v1099, %v1106
        %v1108 = vrot.slane %v1103, 4
        %v1109 = vsel %vm698, %v1108, %v1091
        %v1110 = vrot.slane %v1091, 4
        %v1111 = vsel %vm698, %v1103, %v1110
        %v1112 = vsel %vm698, %v1052, %v1033
        %v1114 = vunpack.c.l.s4 1983009808
        %v1115 = vunpack.c.0.s8 %v1114
        %v1116 = vperm.slane %v1112, %v1115
        %v1117 = vrot.slane %v1053, 4
        %v1118 = vsel %vm698, %v1117, %v1051
        %v1120 = vunpack.c.l.s4 1983009808
        %v1121 = vunpack.c.0.s8 %v1120
        %v1122 = vperm.slane %v1118, %v1121
        %v1123 = vsel %vm698, %v1056, %v1045
        %v1125 = vunpack.c.l.s4 1983009808
        %v1126 = vunpack.c.0.s8 %v1125
        %v1127 = vperm.slane %v1123, %v1126
        %v1128 = vrot.slane %v1057, 4
        %v1129 = vsel %vm698, %v1128, %v1055
        %v1131 = vunpack.c.l.s4 1983009808
        %v1132 = vunpack.c.0.s8 %v1131
        %v1133 = vperm.slane %v1129, %v1132
        %v1134 = vrot.slane %v1122, 4
        %v1135 = vsel %vm698, %v1134, %v1116
        %v1136 = vrot.slane %v1116, 4
        %v1137 = vsel %vm698, %v1122, %v1136
        %v1139 = vunpack.c.l.s4 1934713408
        %v1140 = vunpack.c.0.s8 %v1139
        %v1141 = vperm.slane %v1135, %v1140
        %v1143 = vunpack.c.l.s4 1934713408
        %v1144 = vunpack.c.0.s8 %v1143
        %v1145 = vperm.slane %v1137, %v1144
        %v1146 = vrot.slane %v1133, 4
        %v1147 = vsel %vm698, %v1146, %v1127
        %v1148 = vrot.slane %v1127, 4
        %v1149 = vsel %vm698, %v1133, %v1148
        %v1151 = vunpack.c.l.s4 1934713408
        %v1152 = vunpack.c.0.s8 %v1151
        %v1153 = vperm.slane %v1147, %v1152
        %v1155 = vunpack.c.l.s4 1934713408
        %v1156 = vunpack.c.0.s8 %v1155
        %v1157 = vperm.slane %v1149, %v1156
        %v1158 = vrot.slane %v1153, 4
        %v1159 = vsel %vm698, %v1158, %v1141
        %v1160 = vrot.slane %v1141, 4
        %v1161 = vsel %vm698, %v1153, %v1160
        %v1162 = vrot.slane %v1157, 4
        %v1163 = vsel %vm698, %v1162, %v1145
        %v1164 = vrot.slane %v1145, 4
        %v1165 = vsel %vm698, %v1157, %v1164
        %v1166 = vpack.c.bf16 %v1105, %v1105
        %v1167 = vpack.c.bf16 %v1159, %v1159
        %v1168 = vpack.c.bf16 %v1107, %v1107
        %v1169 = vpack.c.bf16 %v1161, %v1161
        %v1170 = vpack.c.bf16 %v1109, %v1109
        %v1171 = vpack.c.bf16 %v1163, %v1163
        %v1172 = vpack.c.bf16 %v1111, %v1111
        %v1173 = vpack.c.bf16 %v1165, %v1165
        %vm1174 = vcmp.gt.f32.partialorder %v565, 0.0
        %v1175 = vsel %vm1174, 0.0, -1e+09
        loop: start=0, step=1, limit=2
        $region89: #{tpu_custom_call.1} parent=79 // loop_pre_header
          _
        $region90: #{tpu_custom_call.1} parent=79 // loop_header
          %s1177 = sphi 0, %s1181
          %p1178 = scmp.ge.s32.totalorder %s1177, 2
        $region91: #{tpu_custom_call.1} parent=79 // loop_header_branch
          %1180 = sbr.rel (%p1178) target = $region95
        $region92: #{tpu_custom_call.1} parent=79 // loop_body
          %s1182 = smul.u32 %s1177, 8
          %s1183 = sshra.s32 %s1182, 3
          %s1184 = sand.u32 %s1182, 7
          %s1185 = smul.addr %s1183, 4
          %s1186 = scalar_lea.vmem [#allocation2], %s1185
          %v1187 = vld [vmem:[%s1186] sm:$0xf]
          %1189 = vrot.lane.b32.xlu0 %v1187, 112
          %v1190 = vpop.permute.xlu0 %1189
          %1191 = vrot.lane.b32.xlu0 %v1187, 96
          %v1192 = vpop.permute.xlu0 %1191
          %1193 = vrot.lane.b32.xlu0 %v1187, 80
          %v1194 = vpop.permute.xlu0 %1193
          %v1197 = vpack.i.b16 %v1190, %v1187
          %v1198 = vshrl.u32 %v1187, 16
          %v1199 = vshrl.u32 %v1190, 16
          %v1200 = vpack.i.b16 %v1199, %v1198
          %v1203 = vpack.i.b16 %v1194, %v1192
          %v1204 = vshrl.u32 %v1192, 16
          %v1205 = vshrl.u32 %v1194, 16
          %v1206 = vpack.i.b16 %v1205, %v1204
          %v1209 = vunpack.c.l.s4 1983009808
          %v1210 = vunpack.c.0.s8 %v1209
          %v1211 = vperm.slane %v1197, %v1210
          %v1214 = vunpack.c.l.s4 1983009808
          %v1215 = vunpack.c.0.s8 %v1214
          %v1216 = vperm.slane %v1203, %v1215
          %v1217 = vrot.slane %v1216, 4
          %vm1218 = vcmask 1047556
          %v1219 = vsel %vm1218, %v1217, %v1211
          %v1220 = vrot.slane %v1211, 4
          %v1221 = vsel %vm1218, %v1216, %v1220
          %v1223 = vunpack.c.l.s4 1934713408
          %v1224 = vunpack.c.0.s8 %v1223
          %v1225 = vperm.slane %v1219, %v1224
          %v1227 = vunpack.c.l.s4 1934713408
          %v1228 = vunpack.c.0.s8 %v1227
          %v1229 = vperm.slane %v1221, %v1228
          %v1230 = vrot.slane %v1225, 4
          %v1231 = vsel %vm1218, 0, %v1230
          %v1232 = vrot.slane %v1229, 4
          %v1233 = vsel %vm1218, 0, %v1232
          %v1236 = vunpack.c.l.s4 1983009808
          %v1237 = vunpack.c.0.s8 %v1236
          %v1238 = vperm.slane %v1200, %v1237
          %v1241 = vunpack.c.l.s4 1983009808
          %v1242 = vunpack.c.0.s8 %v1241
          %v1243 = vperm.slane %v1206, %v1242
          %v1244 = vrot.slane %v1243, 4
          %v1245 = vsel %vm1218, %v1244, %v1238
          %v1246 = vrot.slane %v1238, 4
          %v1247 = vsel %vm1218, %v1243, %v1246
          %v1249 = vunpack.c.l.s4 1934713408
          %v1250 = vunpack.c.0.s8 %v1249
          %v1251 = vperm.slane %v1245, %v1250
          %v1253 = vunpack.c.l.s4 1934713408
          %v1254 = vunpack.c.0.s8 %v1253
          %v1255 = vperm.slane %v1247, %v1254
          %v1256 = vrot.slane %v1251, 4
          %v1257 = vsel %vm1218, 0, %v1256
          %v1258 = vrot.slane %v1255, 4
          %v1259 = vsel %vm1218, 0, %v1258
          %v1260 = vsel %vm1218, %v1232, %v1225
          %v1262 = vunpack.c.l.s4 1983009808
          %v1263 = vunpack.c.0.s8 %v1262
          %v1264 = vperm.slane %v1260, %v1263
          %v1265 = vrot.slane %v1233, 4
          %v1266 = vsel %vm1218, %v1265, %v1231
          %v1268 = vunpack.c.l.s4 1983009808
          %v1269 = vunpack.c.0.s8 %v1268
          %v1270 = vperm.slane %v1266, %v1269
          %v1271 = vrot.slane %v1270, 4
          %v1272 = vsel %vm1218, %v1271, %v1264
          %v1274 = vunpack.c.l.s4 1934713408
          %v1275 = vunpack.c.0.s8 %v1274
          %v1276 = vperm.slane %v1272, %v1275
          %v1277 = vrot.slane %v1276, 4
          %v1278 = vsel %vm1218, 0, %v1277
          %v1279 = vsel %vm1218, %v1258, %v1251
          %v1281 = vunpack.c.l.s4 1983009808
          %v1282 = vunpack.c.0.s8 %v1281
          %v1283 = vperm.slane %v1279, %v1282
          %v1284 = vrot.slane %v1259, 4
          %v1285 = vsel %vm1218, %v1284, %v1257
          %v1287 = vunpack.c.l.s4 1983009808
          %v1288 = vunpack.c.0.s8 %v1287
          %v1289 = vperm.slane %v1285, %v1288
          %v1290 = vrot.slane %v1289, 4
          %v1291 = vsel %vm1218, %v1290, %v1283
          %v1293 = vunpack.c.l.s4 1934713408
          %v1294 = vunpack.c.0.s8 %v1293
          %v1295 = vperm.slane %v1291, %v1294
          %v1296 = vrot.slane %v1295, 4
          %v1297 = vsel %vm1218, 0, %v1296
          %v1300 = vpack.i.b16 %v1295, %v1276
          %v1301 = vshrl.u32 %v1276, 16
          %v1302 = vshrl.u32 %v1295, 16
          %v1303 = vpack.i.b16 %v1302, %v1301
          %v1306 = vpack.i.b16 %v1297, %v1278
          %v1307 = vshrl.u32 %v1278, 16
          %v1308 = vshrl.u32 %v1297, 16
          %v1309 = vpack.i.b16 %v1308, %v1307
          %v1311 = vperm.slane %v1175, 0
          %v1315 = vunpack.c.l.b16 %v918
          %v1316 = vunpack.c.l.b16 %v919
          %v1317 = vpack.c.b16 %v1316, %v1315
          %vm1318 = vcmask 130048
          %v1320 = vsel %vm1318, %v1300, 0
          %v1323 = vsel %vm1318, %v1317, 0
          %1325 = vmatpush.bf16.xpose.msra.mxu0 0
          %1326 = vmatpush.bf16.xpose.msra.mxu0 0
          %1327 = vmatpush.bf16.xpose.msra.mxu0 0
          %1328 = vmatpush.bf16.xpose.msra.mxu0 0
          %1329 = vmatpush.bf16.xpose.msra.mxu0 0
          %1330 = vmatpush.bf16.xpose.msra.mxu0 0
          %1331 = vmatpush.bf16.xpose.msra.mxu0 0
          %1332 = vmatpush.bf16.xpose.msra.mxu0 %v1323
          %1333 = vmatmul.bf16.gmra.mxu0 %v1320
          %v1334 = vpop.f32.mrf.mxu0
          %v1335 = vadd.f32 %v1311, %v1334
          %v1336 = vpop.f32.mrf.mxu0
          %1337 = vdwg.mxu0
          %v1340 = vunpack.c.l.b16 %v920
          %v1341 = vunpack.c.l.b16 %v921
          %v1342 = vpack.c.b16 %v1341, %v1340
          %v1344 = vsel %vm1318, %v1303, 0
          %v1347 = vsel %vm1318, %v1342, 0
          %1349 = vmatpush.bf16.xpose.msra.mxu0 0
          %1350 = vmatpush.bf16.xpose.msra.mxu0 0
          %1351 = vmatpush.bf16.xpose.msra.mxu0 0
          %1352 = vmatpush.bf16.xpose.msra.mxu0 0
          %1353 = vmatpush.bf16.xpose.msra.mxu0 0
          %1354 = vmatpush.bf16.xpose.msra.mxu0 0
          %1355 = vmatpush.bf16.xpose.msra.mxu0 0
          %1356 = vmatpush.bf16.xpose.msra.mxu0 %v1347
          %1357 = vmatmul.bf16.gmra.mxu0 %v1344
          %v1358 = vpop.f32.mrf.mxu0
          %v1359 = vadd.f32 %v1311, %v1358
          %v1360 = vpop.f32.mrf.mxu0
          %1361 = vdwg.mxu0
          %v1364 = vunpack.c.l.b16 %v922
          %v1365 = vunpack.c.l.b16 %v923
          %v1366 = vpack.c.b16 %v1365, %v1364
          %v1368 = vsel %vm1318, %v1306, 0
          %v1371 = vsel %vm1318, %v1366, 0
          %1373 = vmatpush.bf16.xpose.msra.mxu0 0
          %1374 = vmatpush.bf16.xpose.msra.mxu0 0
          %1375 = vmatpush.bf16.xpose.msra.mxu0 0
          %1376 = vmatpush.bf16.xpose.msra.mxu0 0
          %1377 = vmatpush.bf16.xpose.msra.mxu0 0
          %1378 = vmatpush.bf16.xpose.msra.mxu0 0
          %1379 = vmatpush.bf16.xpose.msra.mxu0 0
          %1380 = vmatpush.bf16.xpose.msra.mxu0 %v1371
          %1381 = vmatmul.bf16.gmra.mxu0 %v1368
          %v1382 = vpop.f32.mrf.mxu0
          %v1383 = vadd.f32 %v1311, %v1382
          %v1384 = vpop.f32.mrf.mxu0
          %1385 = vdwg.mxu0
          %v1388 = vunpack.c.l.b16 %v924
          %v1389 = vunpack.c.l.b16 %v925
          %v1390 = vpack.c.b16 %v1389, %v1388
          %v1392 = vsel %vm1318, %v1309, 0
          %v1395 = vsel %vm1318, %v1390, 0
          %1397 = vmatpush.bf16.xpose.msra.mxu0 0
          %1398 = vmatpush.bf16.xpose.msra.mxu0 0
          %1399 = vmatpush.bf16.xpose.msra.mxu0 0
          %1400 = vmatpush.bf16.xpose.msra.mxu0 0
          %1401 = vmatpush.bf16.xpose.msra.mxu0 0
          %1402 = vmatpush.bf16.xpose.msra.mxu0 0
          %1403 = vmatpush.bf16.xpose.msra.mxu0 0
          %1404 = vmatpush.bf16.xpose.msra.mxu0 %v1395
          %1405 = vmatmul.bf16.gmra.mxu0 %v1392
          %v1406 = vpop.f32.mrf.mxu0
          %v1407 = vadd.f32 %v1311, %v1406
          %v1408 = vpop.f32.mrf.mxu0
          %1409 = vdwg.mxu0
          %v1410 = vsel %vm1318, %v1335, -inf
          %1411 = vmax.xlane.f32.xlu0 %v1410
          %v1412 = vpop.xlane.xlu0 %1411
          %v1413 = vsel %vm1318, %v1359, -inf
          %1414 = vmax.xlane.f32.xlu0 %v1413
          %v1415 = vpop.xlane.xlu0 %1414
          %v1416 = vsel %vm1318, %v1383, -inf
          %1417 = vmax.xlane.f32.xlu0 %v1416
          %v1418 = vpop.xlane.xlu0 %1417
          %v1419 = vsel %vm1318, %v1407, -inf
          %1420 = vmax.xlane.f32.xlu0 %v1419
          %v1421 = vpop.xlane.xlu0 %1420
          %v1422 = vsub.f32 %v1335, %v1412
          %v1423 = vsub.f32 %v1359, %v1415
          %v1424 = vsub.f32 %v1383, %v1418
          %v1425 = vsub.f32 %v1407, %v1421
          %v1426 = vmul.f32 %v1422, 1.442695
          %v1427 = vpow.pop %v1426
          %v1428 = vmul.f32 %v1423, 1.442695
          %v1429 = vpow.pop %v1428
          %v1430 = vmul.f32 %v1424, 1.442695
          %v1431 = vpow.pop %v1430
          %v1432 = vmul.f32 %v1425, 1.442695
          %v1433 = vpow.pop %v1432
          %v1434 = vsel %vm1318, %v1427, 0.0
          %1435 = vadd.xlane.f32.xlu0 %v1434
          %v1436 = vpop.xlane.xlu0 %1435
          %v1437 = vsel %vm1318, %v1429, 0.0
          %1438 = vadd.xlane.f32.xlu0 %v1437
          %v1439 = vpop.xlane.xlu0 %1438
          %v1440 = vsel %vm1318, %v1431, 0.0
          %1441 = vadd.xlane.f32.xlu0 %v1440
          %v1442 = vpop.xlane.xlu0 %1441
          %v1443 = vsel %vm1318, %v1433, 0.0
          %1444 = vadd.xlane.f32.xlu0 %v1443
          %v1445 = vpop.xlane.xlu0 %1444
          %v1446 = vrcp.pop %v1436
          %v1447 = vmul.f32 %v1436, %v1446
          %v1448 = vsub.f32 1.0, %v1447
          %v1449 = vmul.f32 %v1446, %v1448
          %v1450 = vadd.f32 %v1446, %v1449
          %vm1451 = vweird.f32 %v1436
          %vm1452 = vweird.f32 %v1446
          %vm1453 = vmor %vm1451, %vm1452
          %v1454 = vsel %vm1453, %v1446, %v1450
          %v1455 = vand.u32 2147483647, %v1436
          %vm1456 = vcmp.eq.f32.partialorder %v1455, 8.507059e+37
          %v1457 = vand.u32 %v1436, 2147483648
          %v1458 = vor.u32 1.1754944e-38, %v1457
          %v1459 = vsel %vm1456, %v1458, %v1454
          %v1460 = vmul.f32 %v1427, %v1459
          %v1461 = vrcp.pop %v1439
          %v1462 = vmul.f32 %v1439, %v1461
          %v1463 = vsub.f32 1.0, %v1462
          %v1464 = vmul.f32 %v1461, %v1463
          %v1465 = vadd.f32 %v1461, %v1464
          %vm1466 = vweird.f32 %v1439
          %vm1467 = vweird.f32 %v1461
          %vm1468 = vmor %vm1466, %vm1467
          %v1469 = vsel %vm1468, %v1461, %v1465
          %v1470 = vand.u32 2147483647, %v1439
          %vm1471 = vcmp.eq.f32.partialorder %v1470, 8.507059e+37
          %v1472 = vand.u32 %v1439, 2147483648
          %v1473 = vor.u32 1.1754944e-38, %v1472
          %v1474 = vsel %vm1471, %v1473, %v1469
          %v1475 = vmul.f32 %v1429, %v1474
          %v1476 = vrcp.pop %v1442
          %v1477 = vmul.f32 %v1442, %v1476
          %v1478 = vsub.f32 1.0, %v1477
          %v1479 = vmul.f32 %v1476, %v1478
          %v1480 = vadd.f32 %v1476, %v1479
          %vm1481 = vweird.f32 %v1442
          %vm1482 = vweird.f32 %v1476
          %vm1483 = vmor %vm1481, %vm1482
          %v1484 = vsel %vm1483, %v1476, %v1480
          %v1485 = vand.u32 2147483647, %v1442
          %vm1486 = vcmp.eq.f32.partialorder %v1485, 8.507059e+37
          %v1487 = vand.u32 %v1442, 2147483648
          %v1488 = vor.u32 1.1754944e-38, %v1487
          %v1489 = vsel %vm1486, %v1488, %v1484
          %v1490 = vmul.f32 %v1431, %v1489
          %v1491 = vrcp.pop %v1445
          %v1492 = vmul.f32 %v1445, %v1491
          %v1493 = vsub.f32 1.0, %v1492
          %v1494 = vmul.f32 %v1491, %v1493
          %v1495 = vadd.f32 %v1491, %v1494
          %vm1496 = vweird.f32 %v1445
          %vm1497 = vweird.f32 %v1491
          %vm1498 = vmor %vm1496, %vm1497
          %v1499 = vsel %vm1498, %v1491, %v1495
          %v1500 = vand.u32 2147483647, %v1445
          %vm1501 = vcmp.eq.f32.partialorder %v1500, 8.507059e+37
          %v1502 = vand.u32 %v1445, 2147483648
          %v1503 = vor.u32 1.1754944e-38, %v1502
          %v1504 = vsel %vm1501, %v1503, %v1499
          %v1505 = vmul.f32 %v1433, %v1504
          %v1506 = vpack.c.bf16 %v1460, %v1460
          %v1507 = vpack.c.bf16 %v1475, %v1475
          %v1508 = vpack.c.bf16 %v1490, %v1490
          %v1509 = vpack.c.bf16 %v1505, %v1505
          %v1512 = vunpack.c.l.b16 %v1166
          %v1513 = vunpack.c.l.b16 %v1167
          %v1514 = vpack.c.b16 %v1513, %v1512
          %v1517 = vsel %vm1318, %v1506, 0
          %1519 = vmatpush.bf16.msra.mxu0 0
          %1520 = vmatpush.bf16.msra.mxu0 0
          %1521 = vmatpush.bf16.msra.mxu0 0
          %1522 = vmatpush.bf16.msra.mxu0 0
          %1523 = vmatpush.bf16.msra.mxu0 0
          %1524 = vmatpush.bf16.msra.mxu0 0
          %1525 = vmatpush.bf16.msra.mxu0 0
          %1526 = vmatpush.bf16.msra.mxu0 %v1514
          %1527 = vmatmul.bf16.gmra.mxu0 %v1517
          %v1528 = vpop.f32.mrf.mxu0
          %v1529 = vadd.f32 0.0, %v1528
          %v1530 = vpop.f32.mrf.mxu0
          %1531 = vdwg.mxu0
          %v1534 = vunpack.c.l.b16 %v1168
          %v1535 = vunpack.c.l.b16 %v1169
          %v1536 = vpack.c.b16 %v1535, %v1534
          %v1539 = vsel %vm1318, %v1507, 0
          %1541 = vmatpush.bf16.msra.mxu0 0
          %1542 = vmatpush.bf16.msra.mxu0 0
          %1543 = vmatpush.bf16.msra.mxu0 0
          %1544 = vmatpush.bf16.msra.mxu0 0
          %1545 = vmatpush.bf16.msra.mxu0 0
          %1546 = vmatpush.bf16.msra.mxu0 0
          %1547 = vmatpush.bf16.msra.mxu0 0
          %1548 = vmatpush.bf16.msra.mxu0 %v1536
          %1549 = vmatmul.bf16.gmra.mxu0 %v1539
          %v1550 = vpop.f32.mrf.mxu0
          %v1551 = vadd.f32 0.0, %v1550
          %v1552 = vpop.f32.mrf.mxu0
          %1553 = vdwg.mxu0
          %v1556 = vunpack.c.l.b16 %v1170
          %v1557 = vunpack.c.l.b16 %v1171
          %v1558 = vpack.c.b16 %v1557, %v1556
          %v1561 = vsel %vm1318, %v1508, 0
          %1563 = vmatpush.bf16.msra.mxu0 0
          %1564 = vmatpush.bf16.msra.mxu0 0
          %1565 = vmatpush.bf16.msra.mxu0 0
          %1566 = vmatpush.bf16.msra.mxu0 0
          %1567 = vmatpush.bf16.msra.mxu0 0
          %1568 = vmatpush.bf16.msra.mxu0 0
          %1569 = vmatpush.bf16.msra.mxu0 0
          %1570 = vmatpush.bf16.msra.mxu0 %v1558
          %1571 = vmatmul.bf16.gmra.mxu0 %v1561
          %v1572 = vpop.f32.mrf.mxu0
          %v1573 = vadd.f32 0.0, %v1572
          %v1574 = vpop.f32.mrf.mxu0
          %1575 = vdwg.mxu0
          %v1578 = vunpack.c.l.b16 %v1172
          %v1579 = vunpack.c.l.b16 %v1173
          %v1580 = vpack.c.b16 %v1579, %v1578
          %v1583 = vsel %vm1318, %v1509, 0
          %1585 = vmatpush.bf16.msra.mxu0 0
          %1586 = vmatpush.bf16.msra.mxu0 0
          %1587 = vmatpush.bf16.msra.mxu0 0
          %1588 = vmatpush.bf16.msra.mxu0 0
          %1589 = vmatpush.bf16.msra.mxu0 0
          %1590 = vmatpush.bf16.msra.mxu0 0
          %1591 = vmatpush.bf16.msra.mxu0 0
          %1592 = vmatpush.bf16.msra.mxu0 %v1580
          %1593 = vmatmul.bf16.gmra.mxu0 %v1583
          %v1594 = vpop.f32.mrf.mxu0
          %v1595 = vadd.f32 0.0, %v1594
          %v1596 = vpop.f32.mrf.mxu0
          %1597 = vdwg.mxu0
          %v1598 = vrot.slane %v1573, 4
          %v1599 = vsel %vm698, %v1598, %v1529
          %v1600 = vrot.slane %v1529, 4
          %v1601 = vsel %vm698, %v1573, %v1600
          %v1603 = vunpack.c.l.s4 1983009808
          %v1604 = vunpack.c.0.s8 %v1603
          %v1605 = vperm.slane %v1599, %v1604
          %v1607 = vunpack.c.l.s4 1983009808
          %v1608 = vunpack.c.0.s8 %v1607
          %v1609 = vperm.slane %v1601, %v1608
          %v1610 = vrot.slane %v1595, 4
          %v1611 = vsel %vm698, %v1610, %v1551
          %v1612 = vrot.slane %v1551, 4
          %v1613 = vsel %vm698, %v1595, %v1612
          %v1615 = vunpack.c.l.s4 1983009808
          %v1616 = vunpack.c.0.s8 %v1615
          %v1617 = vperm.slane %v1611, %v1616
          %v1619 = vunpack.c.l.s4 1983009808
          %v1620 = vunpack.c.0.s8 %v1619
          %v1621 = vperm.slane %v1613, %v1620
          %v1622 = vrot.slane %v1617, 4
          %v1623 = vsel %vm698, %v1622, %v1605
          %v1624 = vrot.slane %v1605, 4
          %v1625 = vsel %vm698, %v1617, %v1624
          %v1627 = vunpack.c.l.s4 1934713408
          %v1628 = vunpack.c.0.s8 %v1627
          %v1629 = vperm.slane %v1623, %v1628
          %v1631 = vunpack.c.l.s4 1934713408
          %v1632 = vunpack.c.0.s8 %v1631
          %v1633 = vperm.slane %v1625, %v1632
          %v1634 = vrot.slane %v1621, 4
          %v1635 = vsel %vm698, %v1634, %v1609
          %v1636 = vrot.slane %v1609, 4
          %v1637 = vsel %vm698, %v1621, %v1636
          %v1639 = vunpack.c.l.s4 1934713408
          %v1640 = vunpack.c.0.s8 %v1639
          %v1641 = vperm.slane %v1635, %v1640
          %v1643 = vunpack.c.l.s4 1934713408
          %v1644 = vunpack.c.0.s8 %v1643
          %v1645 = vperm.slane %v1637, %v1644
          %v1646 = vrot.slane %v1629, 4
          %v1647 = vsel %vm698, 0.0, %v1646
          %v1648 = vrot.slane %v1633, 4
          %v1649 = vsel %vm698, 0.0, %v1648
          %v1650 = vrot.slane %v1641, 4
          %v1651 = vsel %vm698, 0.0, %v1650
          %v1652 = vrot.slane %v1645, 4
          %v1653 = vsel %vm698, 0.0, %v1652
          %v1654 = vsel %vm698, %v1648, %v1629
          %v1656 = vunpack.c.l.s4 1983009808
          %v1657 = vunpack.c.0.s8 %v1656
          %v1658 = vperm.slane %v1654, %v1657
          %v1659 = vrot.slane %v1649, 4
          %v1660 = vsel %vm698, %v1659, %v1647
          %v1662 = vunpack.c.l.s4 1983009808
          %v1663 = vunpack.c.0.s8 %v1662
          %v1664 = vperm.slane %v1660, %v1663
          %v1665 = vsel %vm698, %v1652, %v1641
          %v1667 = vunpack.c.l.s4 1983009808
          %v1668 = vunpack.c.0.s8 %v1667
          %v1669 = vperm.slane %v1665, %v1668
          %v1670 = vrot.slane %v1653, 4
          %v1671 = vsel %vm698, %v1670, %v1651
          %v1673 = vunpack.c.l.s4 1983009808
          %v1674 = vunpack.c.0.s8 %v1673
          %v1675 = vperm.slane %v1671, %v1674
          %v1676 = vrot.slane %v1664, 4
          %v1677 = vsel %vm698, %v1676, %v1658
          %v1678 = vrot.slane %v1658, 4
          %v1679 = vsel %vm698, %v1664, %v1678
          %v1681 = vunpack.c.l.s4 1934713408
          %v1682 = vunpack.c.0.s8 %v1681
          %v1683 = vperm.slane %v1677, %v1682
          %v1685 = vunpack.c.l.s4 1934713408
          %v1686 = vunpack.c.0.s8 %v1685
          %v1687 = vperm.slane %v1679, %v1686
          %v1688 = vrot.slane %v1675, 4
          %v1689 = vsel %vm698, %v1688, %v1669
          %v1690 = vrot.slane %v1669, 4
          %v1691 = vsel %vm698, %v1675, %v1690
          %v1693 = vunpack.c.l.s4 1934713408
          %v1694 = vunpack.c.0.s8 %v1693
          %v1695 = vperm.slane %v1689, %v1694
          %v1697 = vunpack.c.l.s4 1934713408
          %v1698 = vunpack.c.0.s8 %v1697
          %v1699 = vperm.slane %v1691, %v1698
          %v1700 = vrot.slane %v1695, 4
          %v1701 = vsel %vm698, %v1700, %v1683
          %v1702 = vrot.slane %v1683, 4
          %v1703 = vsel %vm698, %v1695, %v1702
          %v1704 = vrot.slane %v1699, 4
          %v1705 = vsel %vm698, %v1704, %v1687
          %v1706 = vrot.slane %v1687, 4
          %v1707 = vsel %vm698, %v1699, %v1706
          %1709 = vrot.lane.b32.xlu0 %v1703, 16
          %v1710 = vpop.permute.xlu0 %1709
          %1713 = vrot.lane.b32.xlu0 %v1705, 32
          %v1714 = vpop.permute.xlu0 %1713
          %1717 = vrot.lane.b32.xlu0 %v1707, 48
          %v1718 = vpop.permute.xlu0 %1717
          %v1720 = vsel %vm1318, %v1701, %v1710
          %vm1721 = vcmask 261120
          %v1722 = vsel %vm1721, %v1720, %v1714
          %vm1723 = vcmask 392192
          %v1724 = vsel %vm1723, %v1722, %v1718
          %v1725 = vpack.c.bf16 %v1724, %v1724
          %v1726 = vld [vmem:[#allocation3] sm:$0xf]
          %v1727 = vld [vmem:[#allocation3 + $0x4] sm:$0xf]
          %v1728 = vld [vmem:[#allocation3 + $0x8] sm:$0xf]
          %v1729 = vld [vmem:[#allocation3 + $0xc] sm:$0xf]
          %v1730 = vld [vmem:[#allocation3 + $0x10] sm:$0xf]
          %v1731 = vld [vmem:[#allocation3 + $0x14] sm:$0xf]
          %v1732 = vld [vmem:[#allocation3 + $0x18] sm:$0xf]
          %v1733 = vld [vmem:[#allocation3 + $0x1c] sm:$0xf]
          %v1734 = vld [vmem:[%s6] sm:$0x1]
          %v1736 = vperm.slane %v1734, 0
          %v1746 = vunpack.c.l.b16 %v1726
          %v1747 = vunpack.c.l.b16 %v1727
          %v1748 = vunpack.c.l.b16 %v1728
          %v1749 = vunpack.c.l.b16 %v1729
          %v1750 = vunpack.c.l.b16 %v1730
          %v1751 = vunpack.c.l.b16 %v1731
          %v1752 = vunpack.c.l.b16 %v1732
          %v1753 = vunpack.c.l.b16 %v1733
          %v1754 = vpack.c.b16 %v1747, %v1746
          %v1755 = vpack.c.b16 %v1749, %v1748
          %v1756 = vpack.c.b16 %v1751, %v1750
          %v1757 = vpack.c.b16 %v1753, %v1752
          %v1763 = vsel %vm620, %v1725, 0
          %1765 = vmatpush.bf16.msra.mxu0 0
          %1766 = vmatpush.bf16.msra.mxu0 0
          %1767 = vmatpush.bf16.msra.mxu0 0
          %1768 = vmatpush.bf16.msra.mxu0 0
          %1769 = vmatpush.bf16.msra.mxu0 %v1757
          %1770 = vmatpush.bf16.msra.mxu0 %v1756
          %1771 = vmatpush.bf16.msra.mxu0 %v1755
          %1772 = vmatpush.bf16.msra.mxu0 %v1754
          %1773 = vmatmul.bf16.gmra.mxu0 %v1763
          %v1774 = vpop.f32.mrf.mxu0
          %v1775 = vadd.f32 %v1736, %v1774
          %v1776 = vpop.f32.mrf.mxu0
          %1777 = vdwg.mxu0
          %s1778 = scalar_lea.vmem %s552, %s1182
          %v1779 = vld [vmem:[%s1778] sm:$0xff]
          %s1780 = scalar_lea.vmem %s560, %s1182
          %v1781 = vld [vmem:[%s1780] sm:$0xff]
          %v1782 = vadd.f32 %v1779, %v1775
          %v1783 = vld [vmem:[%s7] sm:$0x1]
          %v1784 = vld [vmem:[%s8] sm:$0x1]
          %v1785 = vsel %vm620, %v1782, 0.0
          %1786 = vadd.xlane.f32.xlu0 %v1785
          %v1787 = vpop.xlane.xlu0 %1786
          %v1788 = vrcp.pop 64.0
          %v1789 = vmul.f32 64.0, %v1788
          %v1790 = vsub.f32 1.0, %v1789
          %v1791 = vmul.f32 %v1788, %v1790
          %v1792 = vadd.f32 %v1788, %v1791
          %vm1793 = vweird.f32 %v1788
          %v1794 = vsel %vm1793, %v1788, %v1792
          %v1795 = vmul.f32 %v1787, %v1794
          %v1796 = vsub.f32 %v1782, %v1795
          %v1797 = vmul.f32 %v1796, %v1796
          %v1798 = vsel %vm620, %v1797, 0.0
          %1799 = vadd.xlane.f32.xlu0 %v1798
          %v1800 = vpop.xlane.xlu0 %1799
          %v1801 = vmul.f32 %v1800, %v1794
          %v1802 = vadd.f32 %v1801, 1e-05
          %v1803 = vrsqrt.pop %v1802
          %v1804 = vmul.f32 %v1803, %v1802
          %v1805 = vmul.f32 %v1804, %v1803
          %v1806 = vmul.f32 0.5, %v1805
          %v1807 = vsub.f32 1.5, %v1806
          %v1808 = vmul.f32 %v1803, %v1807
          %vm1809 = vweird.f32 %v1802
          %vm1810 = vweird.f32 %v1803
          %vm1811 = vmor %vm1809, %vm1810
          %v1812 = vsel %vm1811, %v1803, %v1808
          %v1813 = vmul.f32 %v1796, %v1812
          %v1815 = vperm.slane %v1783, 0
          %v1817 = vmul.f32 %v1813, %v1815
          %v1819 = vperm.slane %v1784, 0
          %v1821 = vadd.f32 %v1817, %v1819
          %1823 = vset.pattern.permute.xlu0 0
          %1824 = vperm.xlu0 %1823, %v1781
          %v1825 = vpop.permute.xlu0 %1824
          %v1827 = vmul.f32 %v1821, %v1825
          %v1828 = vpack.c.bf16 %v1827, %v1827
          %v1829 = vld [vmem:[#allocation6] sm:$0xf]
          %v1830 = vld [vmem:[#allocation6 + $0x4] sm:$0xf]
          %v1831 = vld [vmem:[#allocation6 + $0x8] sm:$0xf]
          %v1832 = vld [vmem:[#allocation6 + $0xc] sm:$0xf]
          %v1833 = vld [vmem:[#allocation6 + $0x10] sm:$0xf]
          %v1834 = vld [vmem:[#allocation6 + $0x14] sm:$0xf]
          %v1835 = vld [vmem:[#allocation6 + $0x18] sm:$0xf]
          %v1836 = vld [vmem:[#allocation6 + $0x1c] sm:$0xf]
          %v1837 = vld [vmem:[%s10] sm:$0x1]
          %v1839 = vperm.slane %v1837, 0
          %v1849 = vunpack.c.l.b16 %v1829
          %v1850 = vunpack.c.l.b16 %v1830
          %v1851 = vunpack.c.l.b16 %v1831
          %v1852 = vunpack.c.l.b16 %v1832
          %v1853 = vunpack.c.l.b16 %v1833
          %v1854 = vunpack.c.l.b16 %v1834
          %v1855 = vunpack.c.l.b16 %v1835
          %v1856 = vunpack.c.l.b16 %v1836
          %v1857 = vpack.c.b16 %v1850, %v1849
          %v1858 = vpack.c.b16 %v1852, %v1851
          %v1859 = vpack.c.b16 %v1854, %v1853
          %v1860 = vpack.c.b16 %v1856, %v1855
          %v1866 = vsel %vm620, %v1828, 0
          %1868 = vmatpush.bf16.msra.mxu0 0
          %1869 = vmatpush.bf16.msra.mxu0 0
          %1870 = vmatpush.bf16.msra.mxu0 0
          %1871 = vmatpush.bf16.msra.mxu0 0
          %1872 = vmatpush.bf16.msra.mxu0 %v1860
          %1873 = vmatpush.bf16.msra.mxu0 %v1859
          %1874 = vmatpush.bf16.msra.mxu0 %v1858
          %1875 = vmatpush.bf16.msra.mxu0 %v1857
          %1876 = vmatmul.bf16.gmra.mxu0 %v1866
          %v1877 = vpop.f32.mrf.mxu0
          %v1878 = vadd.f32 %v1839, %v1877
          %v1879 = vpop.f32.mrf.mxu0
          %1880 = vdwg.mxu0
          %v1881 = vmax.f32 %v1878, 0.0
          %v1882 = vpack.c.bf16 %v1881, %v1881
          %v1883 = vld [vmem:[%s11] sm:$0xf]
          %v1884 = vld [vmem:[%s11 + $0x4] sm:$0xf]
          %v1885 = vld [vmem:[%s11 + $0x8] sm:$0xf]
          %v1886 = vld [vmem:[%s11 + $0xc] sm:$0xf]
          %v1887 = vld [vmem:[%s11 + $0x10] sm:$0xf]
          %v1888 = vld [vmem:[%s11 + $0x14] sm:$0xf]
          %v1889 = vld [vmem:[%s11 + $0x18] sm:$0xf]
          %v1890 = vld [vmem:[%s11 + $0x1c] sm:$0xf]
          %v1891 = vld [vmem:[%s11 + $0x20] sm:$0xf]
          %v1892 = vld [vmem:[%s11 + $0x24] sm:$0xf]
          %v1893 = vld [vmem:[%s11 + $0x28] sm:$0xf]
          %v1894 = vld [vmem:[%s11 + $0x2c] sm:$0xf]
          %v1895 = vld [vmem:[%s11 + $0x30] sm:$0xf]
          %v1896 = vld [vmem:[%s11 + $0x34] sm:$0xf]
          %v1897 = vld [vmem:[%s11 + $0x38] sm:$0xf]
          %v1898 = vld [vmem:[%s11 + $0x3c] sm:$0xf]
          %v1899 = vld [vmem:[%s12] sm:$0x1]
          %v1901 = vperm.slane %v1899, 0
          %v1919 = vunpack.c.l.b16 %v1883
          %v1920 = vunpack.c.l.b16 %v1884
          %v1921 = vunpack.c.l.b16 %v1885
          %v1922 = vunpack.c.l.b16 %v1886
          %v1923 = vunpack.c.l.b16 %v1887
          %v1924 = vunpack.c.l.b16 %v1888
          %v1925 = vunpack.c.l.b16 %v1889
          %v1926 = vunpack.c.l.b16 %v1890
          %v1927 = vunpack.c.l.b16 %v1891
          %v1928 = vunpack.c.l.b16 %v1892
          %v1929 = vunpack.c.l.b16 %v1893
          %v1930 = vunpack.c.l.b16 %v1894
          %v1931 = vunpack.c.l.b16 %v1895
          %v1932 = vunpack.c.l.b16 %v1896
          %v1933 = vunpack.c.l.b16 %v1897
          %v1934 = vunpack.c.l.b16 %v1898
          %v1935 = vpack.c.b16 %v1920, %v1919
          %v1936 = vpack.c.b16 %v1922, %v1921
          %v1937 = vpack.c.b16 %v1924, %v1923
          %v1938 = vpack.c.b16 %v1926, %v1925
          %v1939 = vpack.c.b16 %v1928, %v1927
          %v1940 = vpack.c.b16 %v1930, %v1929
          %v1941 = vpack.c.b16 %v1932, %v1931
          %v1942 = vpack.c.b16 %v1934, %v1933
          %1951 = vmatpush.bf16.msra.mxu0 %v1942
          %1952 = vmatpush.bf16.msra.mxu0 %v1941
          %1953 = vmatpush.bf16.msra.mxu0 %v1940
          %1954 = vmatpush.bf16.msra.mxu0 %v1939
          %1955 = vmatpush.bf16.msra.mxu0 %v1938
          %1956 = vmatpush.bf16.msra.mxu0 %v1937
          %1957 = vmatpush.bf16.msra.mxu0 %v1936
          %1958 = vmatpush.bf16.msra.mxu0 %v1935
          %1959 = vmatmul.bf16.gmra.mxu0 %v1882
          %v1960 = vpop.f32.mrf.mxu0
          %v1961 = vadd.f32 %v1901, %v1960
          %v1962 = vpop.f32.mrf.mxu0
          %1963 = vdwg.mxu0
          %v1964 = vadd.f32 %v1827, %v1961
          %v1965 = vld [vmem:[%s13] sm:$0x1]
          %v1966 = vld [vmem:[%s14] sm:$0x1]
          %v1967 = vsel %vm620, %v1964, 0.0
          %1968 = vadd.xlane.f32.xlu0 %v1967
          %v1969 = vpop.xlane.xlu0 %1968
          %v1970 = vmul.f32 %v1969, %v1794
          %v1971 = vsub.f32 %v1964, %v1970
          %v1972 = vmul.f32 %v1971, %v1971
          %v1973 = vsel %vm620, %v1972, 0.0
          %1974 = vadd.xlane.f32.xlu0 %v1973
          %v1975 = vpop.xlane.xlu0 %1974
          %v1976 = vmul.f32 %v1975, %v1794
          %v1977 = vadd.f32 %v1976, 1e-05
          %v1978 = vrsqrt.pop %v1977
          %v1979 = vmul.f32 %v1978, %v1977
          %v1980 = vmul.f32 %v1979, %v1978
          %v1981 = vmul.f32 0.5, %v1980
          %v1982 = vsub.f32 1.5, %v1981
          %v1983 = vmul.f32 %v1978, %v1982
          %vm1984 = vweird.f32 %v1977
          %vm1985 = vweird.f32 %v1978
          %vm1986 = vmor %vm1984, %vm1985
          %v1987 = vsel %vm1986, %v1978, %v1983
          %v1988 = vmul.f32 %v1971, %v1987
          %v1990 = vperm.slane %v1965, 0
          %v1992 = vmul.f32 %v1988, %v1990
          %v1994 = vperm.slane %v1966, 0
          %v1996 = vadd.f32 %v1992, %v1994
          %v1997 = vmul.f32 %v1996, %v1825
          %s1998 = scalar_lea.vmem %s547, %s1182 [#allocation8]
          %1999 = vst.msk [vmem:[%s1998] sm:$0xff] %vm620, %v1997
        $region93: #{tpu_custom_call.1} parent=79 // loop_footer
          %s1181 = sadd.s32 1, %s1177
        $region94: #{tpu_custom_call.1} parent=79 // loop_footer_branch
          %1176 = sbr.rel target = $region90
        $region95: #{tpu_custom_call.1} parent=79 // loop_exit
          _
        %s2000 = sand.u32 %s369, 1
        %s2001 = scalar_lea.sflag [#allocation5], %s2000
        %s2002 = sand.u32 %s369, 1
        %s2003 = smul.addr %s2002, 16
        %s2004 = scalar_lea.vmem [#allocation8], %s2003
        // Predicated region
        $region96: #{tpu_custom_call.1} parent=79 // pred_check
          %p2005 = pneg %p379
        $region97: #{tpu_custom_call.1} parent=79 // pred_check_branch
          %2007 = sbr.rel (%p2005) target = $region99
        $region98: #{tpu_custom_call.1} parent=79 // pred_region
          %2009 = vsyncadd %s2001, 0
          %s2010 = smul.addr %s31, 2
          %s2011 = smul.addr %s2010, 8
          %s2012 = scalar_lea.hbm %s15, %s2011
          %s2013 = sshll.u32 %s2004, 4
          %s2014 = int_to_ptr.vmem [resolvable:$true] %s2013
          %s2015 = sshll.u32 %s2012, 4
          %s2016 = int_to_ptr.hbm [resolvable:$true] %s2015
          %2021 = dma.vmem_to_hbm [thread:$0]  %s2014, 256, %s2016, %s2001, 128, 128, 8
        $region99: #{tpu_custom_call.1} parent=79 // pred_fallthru
          _
      $region80: #{tpu_custom_call.1} parent=5 // pred_fallthru
        _
      %p2022 = scmp.le.s32.totalorder 2, %s26
      // Predicated region
      $region100: #{tpu_custom_call.1} parent=5 // pred_check
        %p2023 = pneg %p2022
      $region101: #{tpu_custom_call.1} parent=5 // pred_check_branch
        %2025 = sbr.rel (%p2023) target = $region103
      $region102: #{tpu_custom_call.1} parent=5 // pred_region
        %s2026 = ssub.s32 %s26, 2
        // Predicated region
        $region104: #{tpu_custom_call.1} parent=102 // pred_check
          %p2027 = pneg %p385
        $region105: #{tpu_custom_call.1} parent=102 // pred_check_branch
          %2029 = sbr.rel (%p2027) target = $region107
        $region106: #{tpu_custom_call.1} parent=102 // pred_region
          %s2030 = sand.u32 %s370, 1
          %s2031 = scalar_lea.sflag [#allocation5], %s2030
          %s2032 = sand.u32 %s370, 1
          %s2033 = smul.addr %s2032, 16
          %s2034 = scalar_lea.vmem [#allocation8], %s2033
          %2036 = dma.done %s2031, 256
        $region107: #{tpu_custom_call.1} parent=102 // pred_fallthru
          _
      $region103: #{tpu_custom_call.1} parent=5 // pred_fallthru
        _
    $region6: #{tpu_custom_call.1} parent=1 // loop_footer
      %s30 = sadd.s32 1, %s26
    $region7: #{tpu_custom_call.1} parent=1 // loop_footer_branch
      %25 = sbr.rel target = $region3
    $region8: #{tpu_custom_call.1} parent=1 // loop_exit
      _
    %2037 = vsyncpa [#allocation4], 1
    %s2038 = scalar_lea.sflag [#allocation4], 1
    %2039 = vsyncpa %s2038, 1
    %2040 = vsyncpa [#allocation7], 1
    %2041 = vsyncpa [#allocation5], 1
    %s2042 = scalar_lea.sflag [#allocation5], 1
    %2043 = vsyncpa %s2042, 1

</llo_original>
